<compile_context>
chip_gen: v5e
topology: v5e:2x2
jax: 0.10.0
libtpu: 0.0.40
codegen_flags: <defaults>
</compile_context>

<pallas_src>
import math

import jax
import jax.numpy as jnp
from jax.experimental import pallas as pl
from jax.experimental.pallas import tpu as pltpu

D_MODEL = 32
N_HEAD = 2
HEAD_DIM = D_MODEL // N_HEAD
D_FF = 256
N_SPKS = 6
IN_DIM = 5
IN_PAD = 8        # sublane-aligned input feature dim (zero padded 5 -> 8)
OUT_PAD = 8       # padded output width (6 -> 8); wrapper slices [:, :6]
LN_EPS = 1e-5

# Row layout of the packed "vecs" (16, 256) f32 array (biases / LN params).
_ROW_BP, _ROW_BQKV, _ROW_BO = 0, 1, 2
_ROW_G1, _ROW_BE1 = 3, 4
_ROW_BF1, _ROW_BF2 = 5, 6
_ROW_G2, _ROW_BE2 = 7, 8
_ROW_BA, _ROW_BB = 9, 10


def _layernorm(x, gamma, beta):
    mu = jnp.mean(x, axis=-1, keepdims=True)
    var = jnp.mean((x - mu) ** 2, axis=-1, keepdims=True)
    return (x - mu) * jax.lax.rsqrt(var + LN_EPS) * gamma + beta


def attention_kernel(x_ref, wp_ref, wqkv_ref, wo_ref, w1_ref, w2_ref,
                     wa_ref, wb_ref, vec_ref, out_ref):
    rows = x_ref.shape[0]            # Bt * L  (pre-flattened host-side)
    Bt = out_ref.shape[0]
    L = rows // Bt

    # Unpack the small vectors (static slices of one resident VMEM tile, f32).
    bp   = vec_ref[_ROW_BP:_ROW_BP + 1, 0:D_MODEL]
    bqkv = vec_ref[_ROW_BQKV:_ROW_BQKV + 1, 0:3 * D_MODEL]
    bo   = vec_ref[_ROW_BO:_ROW_BO + 1, 0:D_MODEL]
    g1   = vec_ref[_ROW_G1:_ROW_G1 + 1, 0:D_MODEL]
    be1  = vec_ref[_ROW_BE1:_ROW_BE1 + 1, 0:D_MODEL]
    bf1  = vec_ref[_ROW_BF1:_ROW_BF1 + 1, 0:D_FF]
    bf2  = vec_ref[_ROW_BF2:_ROW_BF2 + 1, 0:D_MODEL]
    g2   = vec_ref[_ROW_G2:_ROW_G2 + 1, 0:D_MODEL]
    be2  = vec_ref[_ROW_BE2:_ROW_BE2 + 1, 0:D_MODEL]
    ba   = vec_ref[_ROW_BA:_ROW_BA + 1, 0:D_MODEL]
    bb   = vec_ref[_ROW_BB:_ROW_BB + 1, 0:OUT_PAD]

    # prenet on the whole (Bt*L, IN_PAD) slab: bf16 MXU, f32 accumulation.
    h = jnp.dot(x_ref[...], wp_ref[...],
                preferred_element_type=jnp.float32) + bp

    # Fused Q|K|V projection (1/sqrt(HEAD_DIM) already folded into Q columns).
    qkv = jnp.dot(h.astype(jnp.bfloat16), wqkv_ref[...],
                  preferred_element_type=jnp.float32) + bqkv
    qkv3 = qkv.reshape(Bt, L, 3 * D_MODEL)

    q = qkv3[:, :, 0:D_MODEL]
    k = qkv3[:, :, D_MODEL:2 * D_MODEL]
    v = qkv3[:, :, 2 * D_MODEL:3 * D_MODEL]

    # Stack the two heads along the batch axis -> ONE batched matmul pair
    # (batch = 2*Bt) instead of a Python loop over heads.
    qb = jnp.concatenate([q[:, :, :HEAD_DIM], q[:, :, HEAD_DIM:]], axis=0)
    kb = jnp.concatenate([k[:, :, :HEAD_DIM], k[:, :, HEAD_DIM:]], axis=0)
    vb = jnp.concatenate([v[:, :, :HEAD_DIM], v[:, :, HEAD_DIM:]], axis=0)

    s = jnp.einsum("bqd,bkd->bqk", qb, kb,
                   preferred_element_type=jnp.float32)       # (2Bt, L, L)
    s = s - jnp.max(s, axis=-1, keepdims=True)
    p = jnp.exp(s)
    p = p * pl.reciprocal(jnp.sum(p, axis=-1, keepdims=True), approx=True)
    ob = jnp.einsum("bqk,bkd->bqd", p, vb,
                    preferred_element_type=jnp.float32)      # (2Bt, L, HD)

    # Re-merge heads on the lane axis -> single K=32 output projection.
    o = jnp.concatenate([ob[:Bt], ob[Bt:]], axis=-1).reshape(rows, D_MODEL)
    attn = jnp.dot(o.astype(jnp.bfloat16), wo_ref[...],
                   preferred_element_type=jnp.float32) + bo

    # residual + LayerNorm1 (post-norm), f32.
    r = _layernorm(h + attn, g1, be1)

    # feed-forward block (big matmuls in bf16).
    f = jnp.dot(r.astype(jnp.bfloat16), w1_ref[...],
                preferred_element_type=jnp.float32) + bf1
    f = jnp.maximum(f, 0.0)
    f = jnp.dot(f.astype(jnp.bfloat16), w2_ref[...],
                preferred_element_type=jnp.float32) + bf2
    r2 = _layernorm(r + f, g2, be2)

    # mean-pool over length -> (Bt, D)
    stats = jnp.mean(r2.reshape(Bt, L, D_MODEL), axis=1)

    # prediction head: Linear -> ReLU -> Linear (output padded 6 -> 8).
    p1 = jnp.dot(stats.astype(jnp.bfloat16), wa_ref[...],
                 preferred_element_type=jnp.float32) + ba
    p1 = jnp.maximum(p1, 0.0)
    out = jnp.dot(p1.astype(jnp.bfloat16), wb_ref[...],
                  preferred_element_type=jnp.float32) + bb
    out_ref[...] = out                                        # (Bt, 8) f32


def _pack_vecs(p):
    """Pack all small (1, N) vectors into one (16, 256) f32 array."""
    vecs = jnp.zeros((16, 256), jnp.float32)
    scale = 1.0 / math.sqrt(HEAD_DIM)

    def setrow(v, row, arr, n):
        return v.at[row, :n].set(jnp.asarray(arr, jnp.float32).reshape(-1)[:n])

    # Fold the attention scale into the Q bias only (matches wqkv packing).
    bqkv = jnp.concatenate([p["bq"] * scale, p["bk"], p["bv"]], axis=1)
    vecs = setrow(vecs, _ROW_BP, p["bp"], D_MODEL)
    vecs = setrow(vecs, _ROW_BQKV, bqkv, 3 * D_MODEL)
    vecs = setrow(vecs, _ROW_BO, p["bo"], D_MODEL)
    vecs = setrow(vecs, _ROW_G1, p["g1"], D_MODEL)
    vecs = setrow(vecs, _ROW_BE1, p["be1"], D_MODEL)
    vecs = setrow(vecs, _ROW_BF1, p["bf1"], D_FF)
    vecs = setrow(vecs, _ROW_BF2, p["bf2"], D_MODEL)
    vecs = setrow(vecs, _ROW_G2, p["g2"], D_MODEL)
    vecs = setrow(vecs, _ROW_BE2, p["be2"], D_MODEL)
    vecs = setrow(vecs, _ROW_BA, p["ba"], D_MODEL)
    vecs = setrow(vecs, _ROW_BB, p["bb"], N_SPKS)
    return vecs


def _pick_block_b(B, block_b):
    """Batch tile: multiple of 8, cap 1024; >=2 grid steps for mid-sized B."""
    if block_b is None:
        block_b = 1024
        if 512 <= B < 2048:
            block_b = (B + 1) // 2        # >=2 steps -> v7x 2-TC sharding
    Bt = min(((B + 7) // 8) * 8, ((block_b + 7) // 8) * 8)
    return max(8, Bt)


def attention_forward(mels, params, block_b=None):
    B, L, f_in = mels.shape
    assert f_in == IN_DIM, f_in

    Bt = _pick_block_b(B, block_b)
    B_pad = ((B + Bt - 1) // Bt) * Bt

    # Zero-pad batch and feature dims (5 -> 8), flatten to a contiguous
    # (B_pad*L, IN_PAD) bf16 slab so the per-step DMA is a dense block and the
    # kernel needs no input reshape.
    x = jnp.zeros((B_pad, L, IN_PAD), jnp.float32)
    x = x.at[:B, :, :IN_DIM].set(mels.astype(jnp.float32))
    x = x.reshape(B_pad * L, IN_PAD).astype(jnp.bfloat16)

    scale = 1.0 / math.sqrt(HEAD_DIM)
    bf16 = jnp.bfloat16
    wp_pad = jnp.zeros((IN_PAD, D_MODEL), jnp.float32).at[:IN_DIM].set(params["wp"])
    # Fuse Q|K|V; fold the attention scale into the Q columns only.
    wqkv = jnp.concatenate([params["wq"] * scale, params["wk"], params["wv"]],
                           axis=1)
    wb_pad = jnp.zeros((D_MODEL, OUT_PAD), jnp.float32).at[:, :N_SPKS].set(params["wb"])
    vecs = _pack_vecs(params)

    mats = [wp_pad.astype(bf16), wqkv.astype(bf16), params["wo"].astype(bf16),
            params["w1"].astype(bf16), params["w2"].astype(bf16),
            params["wa"].astype(bf16), wb_pad.astype(bf16), vecs]

    def full_spec(a):
        nd = a.ndim
        return pl.BlockSpec(a.shape, lambda i, _nd=nd: (0,) * _nd)

    in_specs = ([pl.BlockSpec((Bt * L, IN_PAD), lambda i: (i, 0))]
                + [full_spec(m) for m in mats])
    out_spec = pl.BlockSpec((Bt, OUT_PAD), lambda i: (i, 0))

    out = pl.pallas_call(
        attention_kernel,
        out_shape=jax.ShapeDtypeStruct((B_pad, OUT_PAD), jnp.float32),
        grid_spec=pltpu.PrefetchScalarGridSpec(
            num_scalar_prefetch=0,
            grid=(B_pad // Bt,),
            in_specs=in_specs,
            out_specs=out_spec,
        ),
        compiler_params=pltpu.CompilerParams(
            dimension_semantics=("parallel",),
            vmem_limit_bytes=48 * 1024 * 1024,
        ),
    )(x, *mats)
    return out[:B, :N_SPKS]                                   # (B, 6)


def init_params(key):
    ks = jax.random.split(key, 16)

    def nrm(k, shape, scale=0.1):
        return (scale * jax.random.normal(k, shape)).astype(jnp.float32)

    return dict(
        wp=nrm(ks[0], (IN_DIM, D_MODEL)),  bp=nrm(ks[1], (1, D_MODEL)),
        wq=nrm(ks[2], (D_MODEL, D_MODEL)), bq=nrm(ks[3], (1, D_MODEL)),
        wk=nrm(ks[4], (D_MODEL, D_MODEL)), bk=nrm(ks[5], (1, D_MODEL)),
        wv=nrm(ks[6], (D_MODEL, D_MODEL)), bv=nrm(ks[7], (1, D_MODEL)),
        wo=nrm(ks[8], (D_MODEL, D_MODEL)), bo=nrm(ks[9], (1, D_MODEL)),
        g1=jnp.ones((1, D_MODEL), jnp.float32),
        be1=jnp.zeros((1, D_MODEL), jnp.float32),
        w1=nrm(ks[10], (D_MODEL, D_FF)),   bf1=nrm(ks[11], (1, D_FF)),
        w2=nrm(ks[12], (D_FF, D_MODEL)),   bf2=nrm(ks[13], (1, D_MODEL)),
        g2=jnp.ones((1, D_MODEL), jnp.float32),
        be2=jnp.zeros((1, D_MODEL), jnp.float32),
        wa=nrm(ks[14], (D_MODEL, D_MODEL)),
        ba=jnp.zeros((1, D_MODEL), jnp.float32),
        wb=nrm(ks[15], (D_MODEL, N_SPKS)),
        bb=jnp.zeros((1, N_SPKS), jnp.float32),
    )


def reference_forward(mels, p):
    """Pure-JAX (f32) mirror of the PyTorch forward (eval mode, batch-first)."""
    h = mels @ p["wp"] + p["bp"]
    q = h @ p["wq"] + p["bq"]
    k = h @ p["wk"] + p["bk"]
    v = h @ p["wv"] + p["bv"]
    B, L, D = h.shape
    qh = q.reshape(B, L, N_HEAD, HEAD_DIM).transpose(0, 2, 1, 3)
    kh = k.reshape(B, L, N_HEAD, HEAD_DIM).transpose(0, 2, 1, 3)
    vh = v.reshape(B, L, N_HEAD, HEAD_DIM).transpose(0, 2, 1, 3)
    s = jnp.einsum("bhqd,bhkd->bhqk", qh, kh) / math.sqrt(HEAD_DIM)
    a = jax.nn.softmax(s, axis=-1)
    o = jnp.einsum("bhqk,bhkd->bhqd", a, vh).transpose(0, 2, 1, 3).reshape(B, L, D)
    o = o @ p["wo"] + p["bo"]

    def ln(x, g, b):
        mu = x.mean(-1, keepdims=True)
        var = ((x - mu) ** 2).mean(-1, keepdims=True)
        return (x - mu) / jnp.sqrt(var + LN_EPS) * g + b

    r = ln(h + o, p["g1"], p["be1"])
    f = jnp.maximum(r @ p["w1"] + p["bf1"], 0.0) @ p["w2"] + p["bf2"]
    r2 = ln(r + f, p["g2"], p["be2"])
    stats = r2.mean(axis=1)
    return jnp.maximum(stats @ p["wa"] + p["ba"], 0.0) @ p["wb"] + p["bb"]


if __name__ == "__main__":
    key = jax.random.PRNGKey(0)
    pkey, xkey = jax.random.split(key)
    params = init_params(pkey)

    B, L = 2, 8
    mels = jax.random.normal(xkey, (B, L, IN_DIM), dtype=jnp.float32)

    out = attention_forward(mels, params)
    out = jax.block_until_ready(out)

    ref = reference_forward(mels, params)
    assert out.shape == (B, N_SPKS), out.shape
    assert jnp.allclose(out, ref, atol=2e-2, rtol=2e-2), (out, ref)
    print("KERNEL_OK")
</pallas_src>

<mosaic_0001>
module attributes {stable_mosaic.version = 11 : i64} {
  func.func @attention_kernel(%arg0: i32, %arg1: memref<64x8xbf16, #tpu.memory_space<vmem>>, %arg2: memref<8x32xbf16, #tpu.memory_space<vmem>>, %arg3: memref<32x96xbf16, #tpu.memory_space<vmem>>, %arg4: memref<32x32xbf16, #tpu.memory_space<vmem>>, %arg5: memref<32x256xbf16, #tpu.memory_space<vmem>>, %arg6: memref<256x32xbf16, #tpu.memory_space<vmem>>, %arg7: memref<32x32xbf16, #tpu.memory_space<vmem>>, %arg8: memref<32x8xbf16, #tpu.memory_space<vmem>>, %arg9: memref<16x256xf32, #tpu.memory_space<vmem>>, %arg10: memref<8x8xf32, #tpu.memory_space<vmem>>) attributes {dimension_semantics = [#tpu.dimension_semantics<parallel>], iteration_bounds = array<i64: 1>, scalar_prefetch = 0 : i64, scratch_operands = 0 : i64, tpu.core_type = #tpu.core_type<tc>, window_params = [{transform_indices = @transform_0, window_bounds = array<i64: 64, 8>}, {pipeline_mode = #tpu.pipeline_mode<synchronous>, transform_indices = @transform_1, window_bounds = array<i64: 8, 32>}, {pipeline_mode = #tpu.pipeline_mode<synchronous>, transform_indices = @transform_2, window_bounds = array<i64: 32, 96>}, {pipeline_mode = #tpu.pipeline_mode<synchronous>, transform_indices = @transform_3, window_bounds = array<i64: 32, 32>}, {pipeline_mode = #tpu.pipeline_mode<synchronous>, transform_indices = @transform_4, window_bounds = array<i64: 32, 256>}, {pipeline_mode = #tpu.pipeline_mode<synchronous>, transform_indices = @transform_5, window_bounds = array<i64: 256, 32>}, {pipeline_mode = #tpu.pipeline_mode<synchronous>, transform_indices = @transform_6, window_bounds = array<i64: 32, 32>}, {pipeline_mode = #tpu.pipeline_mode<synchronous>, transform_indices = @transform_7, window_bounds = array<i64: 32, 8>}, {pipeline_mode = #tpu.pipeline_mode<synchronous>, transform_indices = @transform_8, window_bounds = array<i64: 16, 256>}, {transform_indices = @transform_9, window_bounds = array<i64: 8, 8>}]} {
    %c0 = arith.constant 0 : index
    %c0_0 = arith.constant 0 : index
    %0 = vector.load %arg9[%c0, %c0_0] : memref<16x256xf32, #tpu.memory_space<vmem>>, vector<1x32xf32>
    %c1 = arith.constant 1 : index
    %c0_1 = arith.constant 0 : index
    %1 = vector.load %arg9[%c1, %c0_1] : memref<16x256xf32, #tpu.memory_space<vmem>>, vector<1x96xf32>
    %c2 = arith.constant 2 : index
    %c0_2 = arith.constant 0 : index
    %2 = vector.load %arg9[%c2, %c0_2] : memref<16x256xf32, #tpu.memory_space<vmem>>, vector<1x32xf32>
    %c3 = arith.constant 3 : index
    %c0_3 = arith.constant 0 : index
    %3 = vector.load %arg9[%c3, %c0_3] : memref<16x256xf32, #tpu.memory_space<vmem>>, vector<1x32xf32>
    %c4 = arith.constant 4 : index
    %c0_4 = arith.constant 0 : index
    %4 = vector.load %arg9[%c4, %c0_4] : memref<16x256xf32, #tpu.memory_space<vmem>>, vector<1x32xf32>
    %c5 = arith.constant 5 : index
    %c0_5 = arith.constant 0 : index
    %5 = vector.load %arg9[%c5, %c0_5] : memref<16x256xf32, #tpu.memory_space<vmem>>, vector<1x256xf32>
    %c6 = arith.constant 6 : index
    %c0_6 = arith.constant 0 : index
    %6 = vector.load %arg9[%c6, %c0_6] : memref<16x256xf32, #tpu.memory_space<vmem>>, vector<1x32xf32>
    %c7 = arith.constant 7 : index
    %c0_7 = arith.constant 0 : index
    %7 = vector.load %arg9[%c7, %c0_7] : memref<16x256xf32, #tpu.memory_space<vmem>>, vector<1x32xf32>
    %c8 = arith.constant 8 : index
    %c0_8 = arith.constant 0 : index
    %8 = vector.load %arg9[%c8, %c0_8] : memref<16x256xf32, #tpu.memory_space<vmem>>, vector<1x32xf32>
    %c9 = arith.constant 9 : index
    %c0_9 = arith.constant 0 : index
    %9 = vector.load %arg9[%c9, %c0_9] : memref<16x256xf32, #tpu.memory_space<vmem>>, vector<1x32xf32>
    %c10 = arith.constant 10 : index
    %c0_10 = arith.constant 0 : index
    %10 = vector.load %arg9[%c10, %c0_10] : memref<16x256xf32, #tpu.memory_space<vmem>>, vector<1x8xf32>
    %c0_11 = arith.constant 0 : index
    %c0_12 = arith.constant 0 : index
    %11 = vector.load %arg1[%c0_11, %c0_12] : memref<64x8xbf16, #tpu.memory_space<vmem>>, vector<64x8xbf16>
    %c0_13 = arith.constant 0 : index
    %c0_14 = arith.constant 0 : index
    %12 = vector.load %arg2[%c0_13, %c0_14] : memref<8x32xbf16, #tpu.memory_space<vmem>>, vector<8x32xbf16>
    %cst = arith.constant dense<0.000000e+00> : vector<64x32xf32>
    %13 = tpu.matmul %11, %12, %cst {dimension_numbers = #tpu.dot_dimension_numbers<[1], [0], [0], [1], [0, 0, 1, 1], [], []>} : vector<64x8xbf16>, vector<8x32xbf16>, vector<64x32xf32> -> vector<64x32xf32>
    %14 = vector.broadcast %0 : vector<1x32xf32> to vector<64x32xf32>
    %15 = arith.addf %13, %14 : vector<64x32xf32>
    %16 = arith.truncf %15 : vector<64x32xf32> to vector<64x32xbf16>
    %c0_15 = arith.constant 0 : index
    %c0_16 = arith.constant 0 : index
    %17 = vector.load %arg3[%c0_15, %c0_16] : memref<32x96xbf16, #tpu.memory_space<vmem>>, vector<32x96xbf16>
    %cst_17 = arith.constant dense<0.000000e+00> : vector<64x96xf32>
    %18 = tpu.matmul %16, %17, %cst_17 {dimension_numbers = #tpu.dot_dimension_numbers<[1], [0], [0], [1], [0, 0, 1, 1], [], []>} : vector<64x32xbf16>, vector<32x96xbf16>, vector<64x96xf32> -> vector<64x96xf32>
    %19 = vector.broadcast %1 : vector<1x96xf32> to vector<64x96xf32>
    %20 = arith.addf %18, %19 : vector<64x96xf32>
    %21 = vector.shape_cast %20 : vector<64x96xf32> to vector<8x8x96xf32>
    %22 = vector.extract_strided_slice %21 {offsets = [0, 0, 0], sizes = [8, 8, 32], strides = [1, 1, 1]} : vector<8x8x96xf32> to vector<8x8x32xf32>
    %23 = vector.extract_strided_slice %21 {offsets = [0, 0, 32], sizes = [8, 8, 32], strides = [1, 1, 1]} : vector<8x8x96xf32> to vector<8x8x32xf32>
    %24 = vector.extract_strided_slice %21 {offsets = [0, 0, 64], sizes = [8, 8, 32], strides = [1, 1, 1]} : vector<8x8x96xf32> to vector<8x8x32xf32>
    %25 = vector.extract_strided_slice %22 {offsets = [0, 0, 0], sizes = [8, 8, 16], strides = [1, 1, 1]} : vector<8x8x32xf32> to vector<8x8x16xf32>
    %26 = vector.extract_strided_slice %22 {offsets = [0, 0, 16], sizes = [8, 8, 16], strides = [1, 1, 1]} : vector<8x8x32xf32> to vector<8x8x16xf32>
    %27 = tpu.concatenate %25, %26 in 0 : vector<8x8x16xf32>, vector<8x8x16xf32> -> vector<16x8x16xf32>
    %28 = vector.extract_strided_slice %23 {offsets = [0, 0, 0], sizes = [8, 8, 16], strides = [1, 1, 1]} : vector<8x8x32xf32> to vector<8x8x16xf32>
    %29 = vector.extract_strided_slice %23 {offsets = [0, 0, 16], sizes = [8, 8, 16], strides = [1, 1, 1]} : vector<8x8x32xf32> to vector<8x8x16xf32>
    %30 = tpu.concatenate %28, %29 in 0 : vector<8x8x16xf32>, vector<8x8x16xf32> -> vector<16x8x16xf32>
    %31 = vector.extract_strided_slice %24 {offsets = [0, 0, 0], sizes = [8, 8, 16], strides = [1, 1, 1]} : vector<8x8x32xf32> to vector<8x8x16xf32>
    %32 = vector.extract_strided_slice %24 {offsets = [0, 0, 16], sizes = [8, 8, 16], strides = [1, 1, 1]} : vector<8x8x32xf32> to vector<8x8x16xf32>
    %33 = tpu.concatenate %31, %32 in 0 : vector<8x8x16xf32>, vector<8x8x16xf32> -> vector<16x8x16xf32>
    "tpu.trace_start"() <{level = 10 : i32, message = "bqd,bkd->bqk"}> : () -> ()
    %cst_18 = arith.constant dense<0.000000e+00> : vector<16x8x8xf32>
    %34 = tpu.matmul %27, %30, %cst_18 {dimension_numbers = #tpu.dot_dimension_numbers<[2], [2], [1], [1], [0, 0, 0, 1, 1, 1], [0], [0]>} : vector<16x8x16xf32>, vector<16x8x16xf32>, vector<16x8x8xf32> -> vector<16x8x8xf32>
    "tpu.trace_stop"() : () -> ()
    %cst_19 = arith.constant dense<0xFF800000> : vector<16x8xf32>
    %35 = vector.multi_reduction <maximumf>, %34, %cst_19 [2] : vector<16x8x8xf32> to vector<16x8xf32>
    %36 = vector.shape_cast %35 : vector<16x8xf32> to vector<16x8x1xf32>
    %37 = vector.broadcast %36 : vector<16x8x1xf32> to vector<16x8x8xf32>
    %38 = arith.subf %34, %37 : vector<16x8x8xf32>
    %39 = math.exp %38 : vector<16x8x8xf32>
    %cst_20 = arith.constant dense<0.000000e+00> : vector<16x8xf32>
    %40 = vector.multi_reduction <add>, %39, %cst_20 [2] : vector<16x8x8xf32> to vector<16x8xf32>
    %41 = vector.shape_cast %40 : vector<16x8xf32> to vector<16x8x1xf32>
    %42 = tpu.reciprocal %41 {approx = true} : vector<16x8x1xf32> -> vector<16x8x1xf32>
    %43 = vector.broadcast %42 : vector<16x8x1xf32> to vector<16x8x8xf32>
    %44 = arith.mulf %39, %43 : vector<16x8x8xf32>
    "tpu.trace_start"() <{level = 10 : i32, message = "bqk,bkd->bqd"}> : () -> ()
    %cst_21 = arith.constant dense<0.000000e+00> : vector<16x8x16xf32>
    %45 = tpu.matmul %44, %33, %cst_21 {dimension_numbers = #tpu.dot_dimension_numbers<[2], [1], [1], [2], [0, 0, 0, 1, 1, 2], [0], [0]>} : vector<16x8x8xf32>, vector<16x8x16xf32>, vector<16x8x16xf32> -> vector<16x8x16xf32>
    "tpu.trace_stop"() : () -> ()
    %46 = vector.extract_strided_slice %45 {offsets = [0, 0, 0], sizes = [8, 8, 16], strides = [1, 1, 1]} : vector<16x8x16xf32> to vector<8x8x16xf32>
    %47 = vector.extract_strided_slice %45 {offsets = [8, 0, 0], sizes = [8, 8, 16], strides = [1, 1, 1]} : vector<16x8x16xf32> to vector<8x8x16xf32>
    %48 = tpu.concatenate %46, %47 in 2 : vector<8x8x16xf32>, vector<8x8x16xf32> -> vector<8x8x32xf32>
    %49 = vector.shape_cast %48 : vector<8x8x32xf32> to vector<64x32xf32>
    %50 = arith.truncf %49 : vector<64x32xf32> to vector<64x32xbf16>
    %c0_22 = arith.constant 0 : index
    %c0_23 = arith.constant 0 : index
    %51 = vector.load %arg4[%c0_22, %c0_23] : memref<32x32xbf16, #tpu.memory_space<vmem>>, vector<32x32xbf16>
    %cst_24 = arith.constant dense<0.000000e+00> : vector<64x32xf32>
    %52 = tpu.matmul %50, %51, %cst_24 {dimension_numbers = #tpu.dot_dimension_numbers<[1], [0], [0], [1], [0, 0, 1, 1], [], []>} : vector<64x32xbf16>, vector<32x32xbf16>, vector<64x32xf32> -> vector<64x32xf32>
    %53 = vector.broadcast %2 : vector<1x32xf32> to vector<64x32xf32>
    %54 = arith.addf %52, %53 : vector<64x32xf32>
    %55 = arith.addf %15, %54 : vector<64x32xf32>
    %cst_25 = arith.constant dense<0.000000e+00> : vector<64xf32>
    %56 = vector.multi_reduction <add>, %55, %cst_25 [1] : vector<64x32xf32> to vector<64xf32>
    %57 = vector.shape_cast %56 : vector<64xf32> to vector<64x1xf32>
    %cst_26 = arith.constant 3.200000e+01 : f32
    %58 = vector.broadcast %cst_26 : f32 to vector<64x1xf32>
    %59 = arith.divf %57, %58 : vector<64x1xf32>
    %60 = vector.broadcast %59 : vector<64x1xf32> to vector<64x32xf32>
    %61 = arith.subf %55, %60 : vector<64x32xf32>
    %62 = arith.mulf %61, %61 : vector<64x32xf32>
    %cst_27 = arith.constant dense<0.000000e+00> : vector<64xf32>
    %63 = vector.multi_reduction <add>, %62, %cst_27 [1] : vector<64x32xf32> to vector<64xf32>
    %64 = vector.shape_cast %63 : vector<64xf32> to vector<64x1xf32>
    %cst_28 = arith.constant 3.200000e+01 : f32
    %65 = vector.broadcast %cst_28 : f32 to vector<64x1xf32>
    %66 = arith.divf %64, %65 : vector<64x1xf32>
    %67 = vector.broadcast %59 : vector<64x1xf32> to vector<64x32xf32>
    %68 = arith.subf %55, %67 : vector<64x32xf32>
    %cst_29 = arith.constant 9.99999974E-6 : f32
    %69 = vector.broadcast %cst_29 : f32 to vector<64x1xf32>
    %70 = arith.addf %66, %69 : vector<64x1xf32>
    %71 = math.rsqrt %70 : vector<64x1xf32>
    %72 = vector.broadcast %71 : vector<64x1xf32> to vector<64x32xf32>
    %73 = arith.mulf %68, %72 : vector<64x32xf32>
    %74 = vector.broadcast %3 : vector<1x32xf32> to vector<64x32xf32>
    %75 = arith.mulf %73, %74 : vector<64x32xf32>
    %76 = vector.broadcast %4 : vector<1x32xf32> to vector<64x32xf32>
    %77 = arith.addf %75, %76 : vector<64x32xf32>
    %78 = arith.truncf %77 : vector<64x32xf32> to vector<64x32xbf16>
    %c0_30 = arith.constant 0 : index
    %c0_31 = arith.constant 0 : index
    %79 = vector.load %arg5[%c0_30, %c0_31] : memref<32x256xbf16, #tpu.memory_space<vmem>>, vector<32x256xbf16>
    %cst_32 = arith.constant dense<0.000000e+00> : vector<64x256xf32>
    %80 = tpu.matmul %78, %79, %cst_32 {dimension_numbers = #tpu.dot_dimension_numbers<[1], [0], [0], [1], [0, 0, 1, 1], [], []>} : vector<64x32xbf16>, vector<32x256xbf16>, vector<64x256xf32> -> vector<64x256xf32>
    %81 = vector.broadcast %5 : vector<1x256xf32> to vector<64x256xf32>
    %82 = arith.addf %80, %81 : vector<64x256xf32>
    %cst_33 = arith.constant 0.000000e+00 : f32
    %83 = vector.broadcast %cst_33 : f32 to vector<64x256xf32>
    %84 = arith.maximumf %82, %83 : vector<64x256xf32>
    %85 = arith.truncf %84 : vector<64x256xf32> to vector<64x256xbf16>
    %c0_34 = arith.constant 0 : index
    %c0_35 = arith.constant 0 : index
    %86 = vector.load %arg6[%c0_34, %c0_35] : memref<256x32xbf16, #tpu.memory_space<vmem>>, vector<256x32xbf16>
    %cst_36 = arith.constant dense<0.000000e+00> : vector<64x32xf32>
    %87 = tpu.matmul %85, %86, %cst_36 {dimension_numbers = #tpu.dot_dimension_numbers<[1], [0], [0], [1], [0, 0, 1, 1], [], []>} : vector<64x256xbf16>, vector<256x32xbf16>, vector<64x32xf32> -> vector<64x32xf32>
    %88 = vector.broadcast %6 : vector<1x32xf32> to vector<64x32xf32>
    %89 = arith.addf %87, %88 : vector<64x32xf32>
    %90 = arith.addf %77, %89 : vector<64x32xf32>
    %cst_37 = arith.constant dense<0.000000e+00> : vector<64xf32>
    %91 = vector.multi_reduction <add>, %90, %cst_37 [1] : vector<64x32xf32> to vector<64xf32>
    %92 = vector.shape_cast %91 : vector<64xf32> to vector<64x1xf32>
    %cst_38 = arith.constant 3.200000e+01 : f32
    %93 = vector.broadcast %cst_38 : f32 to vector<64x1xf32>
    %94 = arith.divf %92, %93 : vector<64x1xf32>
    %95 = vector.broadcast %94 : vector<64x1xf32> to vector<64x32xf32>
    %96 = arith.subf %90, %95 : vector<64x32xf32>
    %97 = arith.mulf %96, %96 : vector<64x32xf32>
    %cst_39 = arith.constant dense<0.000000e+00> : vector<64xf32>
    %98 = vector.multi_reduction <add>, %97, %cst_39 [1] : vector<64x32xf32> to vector<64xf32>
    %99 = vector.shape_cast %98 : vector<64xf32> to vector<64x1xf32>
    %cst_40 = arith.constant 3.200000e+01 : f32
    %100 = vector.broadcast %cst_40 : f32 to vector<64x1xf32>
    %101 = arith.divf %99, %100 : vector<64x1xf32>
    %102 = vector.broadcast %94 : vector<64x1xf32> to vector<64x32xf32>
    %103 = arith.subf %90, %102 : vector<64x32xf32>
    %cst_41 = arith.constant 9.99999974E-6 : f32
    %104 = vector.broadcast %cst_41 : f32 to vector<64x1xf32>
    %105 = arith.addf %101, %104 : vector<64x1xf32>
    %106 = math.rsqrt %105 : vector<64x1xf32>
    %107 = vector.broadcast %106 : vector<64x1xf32> to vector<64x32xf32>
    %108 = arith.mulf %103, %107 : vector<64x32xf32>
    %109 = vector.broadcast %7 : vector<1x32xf32> to vector<64x32xf32>
    %110 = arith.mulf %108, %109 : vector<64x32xf32>
    %111 = vector.broadcast %8 : vector<1x32xf32> to vector<64x32xf32>
    %112 = arith.addf %110, %111 : vector<64x32xf32>
    %113 = vector.shape_cast %112 : vector<64x32xf32> to vector<8x8x32xf32>
    %cst_42 = arith.constant dense<0.000000e+00> : vector<8x32xf32>
    %114 = vector.multi_reduction <add>, %113, %cst_42 [1] : vector<8x8x32xf32> to vector<8x32xf32>
    %cst_43 = arith.constant 8.000000e+00 : f32
    %115 = vector.broadcast %cst_43 : f32 to vector<8x32xf32>
    %116 = arith.divf %114, %115 : vector<8x32xf32>
    %117 = arith.truncf %116 : vector<8x32xf32> to vector<8x32xbf16>
    %c0_44 = arith.constant 0 : index
    %c0_45 = arith.constant 0 : index
    %118 = vector.load %arg7[%c0_44, %c0_45] : memref<32x32xbf16, #tpu.memory_space<vmem>>, vector<32x32xbf16>
    %cst_46 = arith.constant dense<0.000000e+00> : vector<8x32xf32>
    %119 = tpu.matmul %117, %118, %cst_46 {dimension_numbers = #tpu.dot_dimension_numbers<[1], [0], [0], [1], [0, 0, 1, 1], [], []>} : vector<8x32xbf16>, vector<32x32xbf16>, vector<8x32xf32> -> vector<8x32xf32>
    %120 = vector.broadcast %9 : vector<1x32xf32> to vector<8x32xf32>
    %121 = arith.addf %119, %120 : vector<8x32xf32>
    %cst_47 = arith.constant 0.000000e+00 : f32
    %122 = vector.broadcast %cst_47 : f32 to vector<8x32xf32>
    %123 = arith.maximumf %121, %122 : vector<8x32xf32>
    %124 = arith.truncf %123 : vector<8x32xf32> to vector<8x32xbf16>
    %c0_48 = arith.constant 0 : index
    %c0_49 = arith.constant 0 : index
    %125 = vector.load %arg8[%c0_48, %c0_49] : memref<32x8xbf16, #tpu.memory_space<vmem>>, vector<32x8xbf16>
    %cst_50 = arith.constant dense<0.000000e+00> : vector<8x8xf32>
    %126 = tpu.matmul %124, %125, %cst_50 {dimension_numbers = #tpu.dot_dimension_numbers<[1], [0], [0], [1], [0, 0, 1, 1], [], []>} : vector<8x32xbf16>, vector<32x8xbf16>, vector<8x8xf32> -> vector<8x8xf32>
    %127 = vector.broadcast %10 : vector<1x8xf32> to vector<8x8xf32>
    %128 = arith.addf %126, %127 : vector<8x8xf32>
    %c0_51 = arith.constant 0 : index
    %c0_52 = arith.constant 0 : index
    %129 = vector.load %arg10[%c0_51, %c0_52] : memref<8x8xf32, #tpu.memory_space<vmem>>, vector<8x8xf32>
    tpu.vector_store %arg10[%c0_51, %c0_52], %128 {strides = array<i32>} : memref<8x8xf32, #tpu.memory_space<vmem>>, vector<8x8xf32>,
    return
  }
  func.func @transform_0(%arg0: i32) -> (i32, i32) {
    %c0_i32 = arith.constant 0 : i32
    %c0_i32_0 = arith.constant 0 : i32
    return %arg0, %c0_i32 : i32, i32
  }
  func.func @transform_1(%arg0: i32) -> (i32, i32) {
    %c0_i32 = arith.constant 0 : i32
    %c0_i32_0 = arith.constant 0 : i32
    %c0_i32_1 = arith.constant 0 : i32
    return %c0_i32, %c0_i32_0 : i32, i32
  }
  func.func @transform_2(%arg0: i32) -> (i32, i32) {
    %c0_i32 = arith.constant 0 : i32
    %c0_i32_0 = arith.constant 0 : i32
    %c0_i32_1 = arith.constant 0 : i32
    return %c0_i32, %c0_i32_0 : i32, i32
  }
  func.func @transform_3(%arg0: i32) -> (i32, i32) {
    %c0_i32 = arith.constant 0 : i32
    %c0_i32_0 = arith.constant 0 : i32
    %c0_i32_1 = arith.constant 0 : i32
    return %c0_i32, %c0_i32_0 : i32, i32
  }
  func.func @transform_4(%arg0: i32) -> (i32, i32) {
    %c0_i32 = arith.constant 0 : i32
    %c0_i32_0 = arith.constant 0 : i32
    %c0_i32_1 = arith.constant 0 : i32
    return %c0_i32, %c0_i32_0 : i32, i32
  }
  func.func @transform_5(%arg0: i32) -> (i32, i32) {
    %c0_i32 = arith.constant 0 : i32
    %c0_i32_0 = arith.constant 0 : i32
    %c0_i32_1 = arith.constant 0 : i32
    return %c0_i32, %c0_i32_0 : i32, i32
  }
  func.func @transform_6(%arg0: i32) -> (i32, i32) {
    %c0_i32 = arith.constant 0 : i32
    %c0_i32_0 = arith.constant 0 : i32
    %c0_i32_1 = arith.constant 0 : i32
    return %c0_i32, %c0_i32_0 : i32, i32
  }
  func.func @transform_7(%arg0: i32) -> (i32, i32) {
    %c0_i32 = arith.constant 0 : i32
    %c0_i32_0 = arith.constant 0 : i32
    %c0_i32_1 = arith.constant 0 : i32
    return %c0_i32, %c0_i32_0 : i32, i32
  }
  func.func @transform_8(%arg0: i32) -> (i32, i32) {
    %c0_i32 = arith.constant 0 : i32
    %c0_i32_0 = arith.constant 0 : i32
    %c0_i32_1 = arith.constant 0 : i32
    return %c0_i32, %c0_i32_0 : i32, i32
  }
  func.func @transform_9(%arg0: i32) -> (i32, i32) {
    %c0_i32 = arith.constant 0 : i32
    %c0_i32_0 = arith.constant 0 : i32
    return %arg0, %c0_i32 : i32, i32
  }
}

</mosaic_0001>

<llo_original>
// kernel: tpu_custom_call.1
$region0: #{tpu_custom_call.1}
  #allocation0 [shape = 'u32[]', space=smem, size = 0x4, offset = 0x4, fixed_abs, tag = 'smem constant byte address 0x4 - core index']
  #allocation1 [shape = 'u32[72,128]{1,0:T(1,128)}', space=vmem, size = 0x9000, scoped, tag = 'internal scratch']
  %s0 = inlined_call_operand.vmem [shape: bf16[64,8], index: 0, kind: input, shape index: {}]
  %s1 = inlined_call_operand.vmem [shape: bf16[8,32], index: 1, kind: input, shape index: {}]
  %s2 = inlined_call_operand.vmem [shape: bf16[32,96], index: 2, kind: input, shape index: {}]
  %s3 = inlined_call_operand.vmem [shape: bf16[32,32], index: 3, kind: input, shape index: {}]
  %s4 = inlined_call_operand.vmem [shape: bf16[32,256], index: 4, kind: input, shape index: {}]
  %s5 = inlined_call_operand.vmem [shape: bf16[256,32], index: 5, kind: input, shape index: {}]
  %s6 = inlined_call_operand.vmem [shape: bf16[32,32], index: 6, kind: input, shape index: {}]
  %s7 = inlined_call_operand.vmem [shape: bf16[32,8], index: 7, kind: input, shape index: {}]
  %s8 = inlined_call_operand.vmem [shape: f32[16,256], index: 8, kind: input, shape index: {}]
  %s9 = inlined_call_operand.hbm [shape: f32[8,8], index: 9, kind: output, shape index: {}]
  %s10 = sld [smem:[#allocation0]]
  $region46: #{tpu_custom_call.1} parent=0
    _
  %s12 = ssub.s32 1, %s10
  %s13 = scalar_select 0, %s12, %s10
  $region1: #{tpu_custom_call.1} parent=0
    #allocation2 [shape = 'u8[4096]{0}', space=vmem, size = 0x1000, scoped, tag = 'output window, operand 0, single buffered']
    #allocation3 [shape = 's32[1]{0}', space=sflag, size = 0x4, scoped, tag = 'scoped memory for tpu_custom_call.1']
    %14 = vsyncpa [#allocation3], 0
    // Predicated region
    $region2: #{tpu_custom_call.1} parent=1 // pred_check
      _
    $region3: #{tpu_custom_call.1} parent=1 // pred_check_branch
      %16 = sbr.rel (0) target = $region5
    $region4: #{tpu_custom_call.1} parent=1 // pred_region
      _
    $region5: #{tpu_custom_call.1} parent=1 // pred_fallthru
      _
    // Predicated region
    $region6: #{tpu_custom_call.1} parent=1 // pred_check
      _
    $region7: #{tpu_custom_call.1} parent=1 // pred_check_branch
      %18 = sbr.rel (0) target = $region9
    $region8: #{tpu_custom_call.1} parent=1 // pred_region
      _
    $region9: #{tpu_custom_call.1} parent=1 // pred_fallthru
      _
    // Predicated region
    $region10: #{tpu_custom_call.1} parent=1 // pred_check
      _
    $region11: #{tpu_custom_call.1} parent=1 // pred_check_branch
      %20 = sbr.rel (0) target = $region13
    $region12: #{tpu_custom_call.1} parent=1 // pred_region
      _
    $region13: #{tpu_custom_call.1} parent=1 // pred_fallthru
      _
    // Predicated region
    $region14: #{tpu_custom_call.1} parent=1 // pred_check
      _
    $region15: #{tpu_custom_call.1} parent=1 // pred_check_branch
      %22 = sbr.rel (0) target = $region17
    $region16: #{tpu_custom_call.1} parent=1 // pred_region
      _
    $region17: #{tpu_custom_call.1} parent=1 // pred_fallthru
      _
    // Predicated region
    $region18: #{tpu_custom_call.1} parent=1 // pred_check
      _
    $region19: #{tpu_custom_call.1} parent=1 // pred_check_branch
      %24 = sbr.rel (0) target = $region21
    $region20: #{tpu_custom_call.1} parent=1 // pred_region
      _
    $region21: #{tpu_custom_call.1} parent=1 // pred_fallthru
      _
    // Predicated region
    $region22: #{tpu_custom_call.1} parent=1 // pred_check
      _
    $region23: #{tpu_custom_call.1} parent=1 // pred_check_branch
      %26 = sbr.rel (0) target = $region25
    $region24: #{tpu_custom_call.1} parent=1 // pred_region
      _
    $region25: #{tpu_custom_call.1} parent=1 // pred_fallthru
      _
    // Predicated region
    $region26: #{tpu_custom_call.1} parent=1 // pred_check
      _
    $region27: #{tpu_custom_call.1} parent=1 // pred_check_branch
      %28 = sbr.rel (0) target = $region29
    $region28: #{tpu_custom_call.1} parent=1 // pred_region
      _
    $region29: #{tpu_custom_call.1} parent=1 // pred_fallthru
      _
    // Predicated region
    $region30: #{tpu_custom_call.1} parent=1 // pred_check
      _
    $region31: #{tpu_custom_call.1} parent=1 // pred_check_branch
      %30 = sbr.rel (0) target = $region33
    $region32: #{tpu_custom_call.1} parent=1 // pred_region
      _
    $region33: #{tpu_custom_call.1} parent=1 // pred_fallthru
      _
    // Predicated region
    $region34: #{tpu_custom_call.1} parent=1 // pred_check
      _
    $region35: #{tpu_custom_call.1} parent=1 // pred_check_branch
      %32 = sbr.rel (0) target = $region37
    $region36: #{tpu_custom_call.1} parent=1 // pred_region
      _
    $region37: #{tpu_custom_call.1} parent=1 // pred_fallthru
      _
    %v34 = vld [vmem:[%s8] ss:$0 sm:$0xff]
    %v35 = vld [vmem:[%s8 + $0x1] ss:$0 sm:$0xff]
    %v36 = vld [vmem:[%s8 + $0x2] ss:$0 sm:$0xff]
    %v37 = vld [vmem:[%s8 + $0x3] ss:$0 sm:$0xff]
    %v38 = vld [vmem:[%s8 + $0x4] ss:$0 sm:$0xff]
    %s39 = scalar_lea.vmem %s8, 5
    %v40 = vld [vmem:[%s39] ss:$8 sm:$0x3]
    %v41 = vld [vmem:[%s8 + $0x6] ss:$0 sm:$0xff]
    %v42 = vld [vmem:[%s8 + $0x7] ss:$0 sm:$0xff]
    %v43 = vld [vmem:[%s8 + $0x10] ss:$0 sm:$0xff]
    %v44 = vld [vmem:[%s8 + $0x11] ss:$0 sm:$0xff]
    %v45 = vld [vmem:[%s8 + $0x12] ss:$0 sm:$0xff]
    %v46 = vld [vmem:[%s0] sm:$0xf]
    %v47 = vld [vmem:[%s0 + $0x4] sm:$0xf]
    %v48 = vld [vmem:[%s0 + $0x8] sm:$0xf]
    %v49 = vld [vmem:[%s0 + $0xc] sm:$0xf]
    %v50 = vld [vmem:[%s0 + $0x10] sm:$0xf]
    %v51 = vld [vmem:[%s0 + $0x14] sm:$0xf]
    %v52 = vld [vmem:[%s0 + $0x18] sm:$0xf]
    %v53 = vld [vmem:[%s0 + $0x1c] sm:$0xf]
    %v54 = vld [vmem:[%s1] sm:$0xf]
    %v63 = vunpack.c.l.b16 %v46
    %v64 = vunpack.c.l.b16 %v47
    %v65 = vunpack.c.l.b16 %v48
    %v66 = vunpack.c.l.b16 %v49
    %v67 = vunpack.c.l.b16 %v50
    %v68 = vunpack.c.l.b16 %v51
    %v69 = vunpack.c.l.b16 %v52
    %v70 = vunpack.c.l.b16 %v53
    %v71 = vpack.c.b16 %v64, %v63
    %v72 = vpack.c.b16 %v66, %v65
    %v73 = vpack.c.b16 %v68, %v67
    %v74 = vpack.c.b16 %v70, %v69
    %vm75 = vcmask 64512
    %v77 = vsel %vm75, %v71, 0
    %v80 = vsel %vm75, %v72, 0
    %v83 = vsel %vm75, %v73, 0
    %v86 = vsel %vm75, %v74, 0
    %vm88 = vcmask 1043456
    %v90 = vsel %vm88, %v54, 0
    %92 = vmatpush.bf16.msra.mxu0 0
    %93 = vmatpush.bf16.msra.mxu0 0
    %94 = vmatpush.bf16.msra.mxu0 0
    %95 = vmatpush.bf16.msra.mxu0 0
    %96 = vmatpush.bf16.msra.mxu0 0
    %97 = vmatpush.bf16.msra.mxu0 0
    %98 = vmatpush.bf16.msra.mxu0 0
    %99 = vmatpush.bf16.msra.mxu0 %v90
    %100 = vmatmul.bf16.gmra.mxu0 %v77
    %v101 = vpop.f32.mrf.mxu0
    %v102 = vadd.f32 %v34, %v101
    %v103 = vpop.f32.mrf.mxu0
    %v104 = vadd.f32 %v34, %v103
    %105 = vmatmul.bf16.gmra.mxu0 %v80
    %v106 = vpop.f32.mrf.mxu0
    %v107 = vadd.f32 %v34, %v106
    %v108 = vpop.f32.mrf.mxu0
    %v109 = vadd.f32 %v34, %v108
    %110 = vmatmul.bf16.gmra.mxu0 %v83
    %v111 = vpop.f32.mrf.mxu0
    %v112 = vadd.f32 %v34, %v111
    %v113 = vpop.f32.mrf.mxu0
    %v114 = vadd.f32 %v34, %v113
    %115 = vmatmul.bf16.gmra.mxu0 %v86
    %v116 = vpop.f32.mrf.mxu0
    %v117 = vadd.f32 %v34, %v116
    %v118 = vpop.f32.mrf.mxu0
    %v119 = vadd.f32 %v34, %v118
    %120 = vdwg.mxu0
    %v121 = vpack.c.bf16 %v104, %v102
    %v122 = vpack.c.bf16 %v109, %v107
    %v123 = vpack.c.bf16 %v114, %v112
    %v124 = vpack.c.bf16 %v119, %v117
    %v125 = vld [vmem:[%s2] sm:$0xf]
    %v126 = vld [vmem:[%s2 + $0x4] sm:$0xf]
    %v127 = vld [vmem:[%s2 + $0x8] sm:$0xf]
    %v128 = vld [vmem:[%s2 + $0xc] sm:$0xf]
    %v133 = vunpack.c.l.b16 %v125
    %v134 = vunpack.c.l.b16 %v126
    %v135 = vunpack.c.l.b16 %v127
    %v136 = vunpack.c.l.b16 %v128
    %v137 = vpack.c.b16 %v134, %v133
    %v138 = vpack.c.b16 %v136, %v135
    %vm141 = vcmask 261120
    %v143 = vsel %vm141, %v121, 0
    %v146 = vsel %vm141, %v122, 0
    %v149 = vsel %vm141, %v123, 0
    %v152 = vsel %vm141, %v124, 0
    %154 = vmatpush.bf16.msra.mxu0 0
    %155 = vmatpush.bf16.msra.mxu0 0
    %156 = vmatpush.bf16.msra.mxu0 0
    %157 = vmatpush.bf16.msra.mxu0 0
    %158 = vmatpush.bf16.msra.mxu0 0
    %159 = vmatpush.bf16.msra.mxu0 0
    %160 = vmatpush.bf16.msra.mxu0 %v138
    %161 = vmatpush.bf16.msra.mxu0 %v137
    %162 = vmatmul.bf16.gmra.mxu0 %v143
    %v163 = vpop.f32.mrf.mxu0
    %v164 = vadd.f32 %v35, %v163
    %v165 = vpop.f32.mrf.mxu0
    %v166 = vadd.f32 %v35, %v165
    %167 = vmatmul.bf16.gmra.mxu0 %v146
    %v168 = vpop.f32.mrf.mxu0
    %v169 = vadd.f32 %v35, %v168
    %v170 = vpop.f32.mrf.mxu0
    %v171 = vadd.f32 %v35, %v170
    %172 = vmatmul.bf16.gmra.mxu0 %v149
    %v173 = vpop.f32.mrf.mxu0
    %v174 = vadd.f32 %v35, %v173
    %v175 = vpop.f32.mrf.mxu0
    %v176 = vadd.f32 %v35, %v175
    %177 = vmatmul.bf16.gmra.mxu0 %v152
    %v178 = vpop.f32.mrf.mxu0
    %v179 = vadd.f32 %v35, %v178
    %v180 = vpop.f32.mrf.mxu0
    %v181 = vadd.f32 %v35, %v180
    %182 = vdwg.mxu0
    %191 = vrot.lane.b32.xlu0 %v164, 112
    %v192 = vpop.permute.xlu0 %191
    %193 = vrot.lane.b32.xlu0 %v166, 112
    %v194 = vpop.permute.xlu0 %193
    %195 = vrot.lane.b32.xlu0 %v169, 112
    %v196 = vpop.permute.xlu0 %195
    %197 = vrot.lane.b32.xlu0 %v171, 112
    %v198 = vpop.permute.xlu0 %197
    %199 = vrot.lane.b32.xlu0 %v174, 112
    %v200 = vpop.permute.xlu0 %199
    %201 = vrot.lane.b32.xlu0 %v176, 112
    %v202 = vpop.permute.xlu0 %201
    %203 = vrot.lane.b32.xlu0 %v179, 112
    %v204 = vpop.permute.xlu0 %203
    %205 = vrot.lane.b32.xlu0 %v181, 112
    %v206 = vpop.permute.xlu0 %205
    %207 = vrot.lane.b32.xlu0 %v164, 96
    %v208 = vpop.permute.xlu0 %207
    %vm209 = vcmask 130048
    %v210 = vsel %vm209, %v164, 0
    %v212 = vsel %vm209, %v208, 0
    %214 = vmatpush.xpose.msra.mxu0 0.0
    %215 = vmatpush.xpose.msra.mxu0 0.0
    %216 = vmatpush.xpose.msra.mxu0 0.0
    %217 = vmatpush.xpose.msra.mxu0 0.0
    %218 = vmatpush.xpose.msra.mxu0 0.0
    %219 = vmatpush.xpose.msra.mxu0 0.0
    %220 = vmatpush.xpose.msra.mxu0 0.0
    %221 = vmatpush.xpose.msra.mxu0 0.0
    %222 = vmatpush.xpose.msra.mxu0 0.0
    %223 = vmatpush.xpose.msra.mxu0 0.0
    %224 = vmatpush.xpose.msra.mxu0 0.0
    %225 = vmatpush.xpose.msra.mxu0 0.0
    %226 = vmatpush.xpose.msra.mxu0 0.0
    %227 = vmatpush.xpose.msra.mxu0 0.0
    %228 = vmatpush.xpose.msra.mxu0 0.0
    %229 = vmatpush.xpose.msra.mxu0 %v212
    %230 = vmatmul.f32.gmra.mxu0 %v210
    %v231 = vpop.f32.mrf.mxu0
    %v232 = vadd.f32 0.0, %v231
    %233 = vdwg.mxu0
    %234 = vrot.lane.b32.xlu0 %v166, 96
    %v235 = vpop.permute.xlu0 %234
    %v236 = vsel %vm209, %v166, 0
    %v238 = vsel %vm209, %v235, 0
    %240 = vmatpush.xpose.msra.mxu0 0.0
    %241 = vmatpush.xpose.msra.mxu0 0.0
    %242 = vmatpush.xpose.msra.mxu0 0.0
    %243 = vmatpush.xpose.msra.mxu0 0.0
    %244 = vmatpush.xpose.msra.mxu0 0.0
    %245 = vmatpush.xpose.msra.mxu0 0.0
    %246 = vmatpush.xpose.msra.mxu0 0.0
    %247 = vmatpush.xpose.msra.mxu0 0.0
    %248 = vmatpush.xpose.msra.mxu0 0.0
    %249 = vmatpush.xpose.msra.mxu0 0.0
    %250 = vmatpush.xpose.msra.mxu0 0.0
    %251 = vmatpush.xpose.msra.mxu0 0.0
    %252 = vmatpush.xpose.msra.mxu0 0.0
    %253 = vmatpush.xpose.msra.mxu0 0.0
    %254 = vmatpush.xpose.msra.mxu0 0.0
    %255 = vmatpush.xpose.msra.mxu0 %v238
    %256 = vmatmul.f32.gmra.mxu0 %v236
    %v257 = vpop.f32.mrf.mxu0
    %v258 = vadd.f32 0.0, %v257
    %259 = vdwg.mxu0
    %260 = vrot.lane.b32.xlu0 %v169, 96
    %v261 = vpop.permute.xlu0 %260
    %v262 = vsel %vm209, %v169, 0
    %v264 = vsel %vm209, %v261, 0
    %266 = vmatpush.xpose.msra.mxu0 0.0
    %267 = vmatpush.xpose.msra.mxu0 0.0
    %268 = vmatpush.xpose.msra.mxu0 0.0
    %269 = vmatpush.xpose.msra.mxu0 0.0
    %270 = vmatpush.xpose.msra.mxu0 0.0
    %271 = vmatpush.xpose.msra.mxu0 0.0
    %272 = vmatpush.xpose.msra.mxu0 0.0
    %273 = vmatpush.xpose.msra.mxu0 0.0
    %274 = vmatpush.xpose.msra.mxu0 0.0
    %275 = vmatpush.xpose.msra.mxu0 0.0
    %276 = vmatpush.xpose.msra.mxu0 0.0
    %277 = vmatpush.xpose.msra.mxu0 0.0
    %278 = vmatpush.xpose.msra.mxu0 0.0
    %279 = vmatpush.xpose.msra.mxu0 0.0
    %280 = vmatpush.xpose.msra.mxu0 0.0
    %281 = vmatpush.xpose.msra.mxu0 %v264
    %282 = vmatmul.f32.gmra.mxu0 %v262
    %v283 = vpop.f32.mrf.mxu0
    %v284 = vadd.f32 0.0, %v283
    %285 = vdwg.mxu0
    %286 = vrot.lane.b32.xlu0 %v171, 96
    %v287 = vpop.permute.xlu0 %286
    %v288 = vsel %vm209, %v171, 0
    %v290 = vsel %vm209, %v287, 0
    %292 = vmatpush.xpose.msra.mxu0 0.0
    %293 = vmatpush.xpose.msra.mxu0 0.0
    %294 = vmatpush.xpose.msra.mxu0 0.0
    %295 = vmatpush.xpose.msra.mxu0 0.0
    %296 = vmatpush.xpose.msra.mxu0 0.0
    %297 = vmatpush.xpose.msra.mxu0 0.0
    %298 = vmatpush.xpose.msra.mxu0 0.0
    %299 = vmatpush.xpose.msra.mxu0 0.0
    %300 = vmatpush.xpose.msra.mxu0 0.0
    %301 = vmatpush.xpose.msra.mxu0 0.0
    %302 = vmatpush.xpose.msra.mxu0 0.0
    %303 = vmatpush.xpose.msra.mxu0 0.0
    %304 = vmatpush.xpose.msra.mxu0 0.0
    %305 = vmatpush.xpose.msra.mxu0 0.0
    %306 = vmatpush.xpose.msra.mxu0 0.0
    %307 = vmatpush.xpose.msra.mxu0 %v290
    %308 = vmatmul.f32.gmra.mxu0 %v288
    %v309 = vpop.f32.mrf.mxu0
    %v310 = vadd.f32 0.0, %v309
    %311 = vdwg.mxu0
    %312 = vrot.lane.b32.xlu0 %v174, 96
    %v313 = vpop.permute.xlu0 %312
    %v314 = vsel %vm209, %v174, 0
    %v316 = vsel %vm209, %v313, 0
    %318 = vmatpush.xpose.msra.mxu0 0.0
    %319 = vmatpush.xpose.msra.mxu0 0.0
    %320 = vmatpush.xpose.msra.mxu0 0.0
    %321 = vmatpush.xpose.msra.mxu0 0.0
    %322 = vmatpush.xpose.msra.mxu0 0.0
    %323 = vmatpush.xpose.msra.mxu0 0.0
    %324 = vmatpush.xpose.msra.mxu0 0.0
    %325 = vmatpush.xpose.msra.mxu0 0.0
    %326 = vmatpush.xpose.msra.mxu0 0.0
    %327 = vmatpush.xpose.msra.mxu0 0.0
    %328 = vmatpush.xpose.msra.mxu0 0.0
    %329 = vmatpush.xpose.msra.mxu0 0.0
    %330 = vmatpush.xpose.msra.mxu0 0.0
    %331 = vmatpush.xpose.msra.mxu0 0.0
    %332 = vmatpush.xpose.msra.mxu0 0.0
    %333 = vmatpush.xpose.msra.mxu0 %v316
    %334 = vmatmul.f32.gmra.mxu0 %v314
    %v335 = vpop.f32.mrf.mxu0
    %v336 = vadd.f32 0.0, %v335
    %337 = vdwg.mxu0
    %338 = vrot.lane.b32.xlu0 %v176, 96
    %v339 = vpop.permute.xlu0 %338
    %v340 = vsel %vm209, %v176, 0
    %v342 = vsel %vm209, %v339, 0
    %344 = vmatpush.xpose.msra.mxu0 0.0
    %345 = vmatpush.xpose.msra.mxu0 0.0
    %346 = vmatpush.xpose.msra.mxu0 0.0
    %347 = vmatpush.xpose.msra.mxu0 0.0
    %348 = vmatpush.xpose.msra.mxu0 0.0
    %349 = vmatpush.xpose.msra.mxu0 0.0
    %350 = vmatpush.xpose.msra.mxu0 0.0
    %351 = vmatpush.xpose.msra.mxu0 0.0
    %352 = vmatpush.xpose.msra.mxu0 0.0
    %353 = vmatpush.xpose.msra.mxu0 0.0
    %354 = vmatpush.xpose.msra.mxu0 0.0
    %355 = vmatpush.xpose.msra.mxu0 0.0
    %356 = vmatpush.xpose.msra.mxu0 0.0
    %357 = vmatpush.xpose.msra.mxu0 0.0
    %358 = vmatpush.xpose.msra.mxu0 0.0
    %359 = vmatpush.xpose.msra.mxu0 %v342
    %360 = vmatmul.f32.gmra.mxu0 %v340
    %v361 = vpop.f32.mrf.mxu0
    %v362 = vadd.f32 0.0, %v361
    %363 = vdwg.mxu0
    %364 = vrot.lane.b32.xlu0 %v179, 96
    %v365 = vpop.permute.xlu0 %364
    %v366 = vsel %vm209, %v179, 0
    %v368 = vsel %vm209, %v365, 0
    %370 = vmatpush.xpose.msra.mxu0 0.0
    %371 = vmatpush.xpose.msra.mxu0 0.0
    %372 = vmatpush.xpose.msra.mxu0 0.0
    %373 = vmatpush.xpose.msra.mxu0 0.0
    %374 = vmatpush.xpose.msra.mxu0 0.0
    %375 = vmatpush.xpose.msra.mxu0 0.0
    %376 = vmatpush.xpose.msra.mxu0 0.0
    %377 = vmatpush.xpose.msra.mxu0 0.0
    %378 = vmatpush.xpose.msra.mxu0 0.0
    %379 = vmatpush.xpose.msra.mxu0 0.0
    %380 = vmatpush.xpose.msra.mxu0 0.0
    %381 = vmatpush.xpose.msra.mxu0 0.0
    %382 = vmatpush.xpose.msra.mxu0 0.0
    %383 = vmatpush.xpose.msra.mxu0 0.0
    %384 = vmatpush.xpose.msra.mxu0 0.0
    %385 = vmatpush.xpose.msra.mxu0 %v368
    %386 = vmatmul.f32.gmra.mxu0 %v366
    %v387 = vpop.f32.mrf.mxu0
    %v388 = vadd.f32 0.0, %v387
    %389 = vdwg.mxu0
    %390 = vrot.lane.b32.xlu0 %v181, 96
    %v391 = vpop.permute.xlu0 %390
    %v392 = vsel %vm209, %v181, 0
    %v394 = vsel %vm209, %v391, 0
    %396 = vmatpush.xpose.msra.mxu0 0.0
    %397 = vmatpush.xpose.msra.mxu0 0.0
    %398 = vmatpush.xpose.msra.mxu0 0.0
    %399 = vmatpush.xpose.msra.mxu0 0.0
    %400 = vmatpush.xpose.msra.mxu0 0.0
    %401 = vmatpush.xpose.msra.mxu0 0.0
    %402 = vmatpush.xpose.msra.mxu0 0.0
    %403 = vmatpush.xpose.msra.mxu0 0.0
    %404 = vmatpush.xpose.msra.mxu0 0.0
    %405 = vmatpush.xpose.msra.mxu0 0.0
    %406 = vmatpush.xpose.msra.mxu0 0.0
    %407 = vmatpush.xpose.msra.mxu0 0.0
    %408 = vmatpush.xpose.msra.mxu0 0.0
    %409 = vmatpush.xpose.msra.mxu0 0.0
    %410 = vmatpush.xpose.msra.mxu0 0.0
    %411 = vmatpush.xpose.msra.mxu0 %v394
    %412 = vmatmul.f32.gmra.mxu0 %v392
    %v413 = vpop.f32.mrf.mxu0
    %v414 = vadd.f32 0.0, %v413
    %415 = vdwg.mxu0
    %416 = vrot.lane.b32.xlu0 %v192, 96
    %v417 = vpop.permute.xlu0 %416
    %v418 = vsel %vm209, %v192, 0
    %v420 = vsel %vm209, %v417, 0
    %422 = vmatpush.xpose.msra.mxu0 0.0
    %423 = vmatpush.xpose.msra.mxu0 0.0
    %424 = vmatpush.xpose.msra.mxu0 0.0
    %425 = vmatpush.xpose.msra.mxu0 0.0
    %426 = vmatpush.xpose.msra.mxu0 0.0
    %427 = vmatpush.xpose.msra.mxu0 0.0
    %428 = vmatpush.xpose.msra.mxu0 0.0
    %429 = vmatpush.xpose.msra.mxu0 0.0
    %430 = vmatpush.xpose.msra.mxu0 0.0
    %431 = vmatpush.xpose.msra.mxu0 0.0
    %432 = vmatpush.xpose.msra.mxu0 0.0
    %433 = vmatpush.xpose.msra.mxu0 0.0
    %434 = vmatpush.xpose.msra.mxu0 0.0
    %435 = vmatpush.xpose.msra.mxu0 0.0
    %436 = vmatpush.xpose.msra.mxu0 0.0
    %437 = vmatpush.xpose.msra.mxu0 %v420
    %438 = vmatmul.f32.gmra.mxu0 %v418
    %v439 = vpop.f32.mrf.mxu0
    %v440 = vadd.f32 0.0, %v439
    %441 = vdwg.mxu0
    %442 = vrot.lane.b32.xlu0 %v194, 96
    %v443 = vpop.permute.xlu0 %442
    %v444 = vsel %vm209, %v194, 0
    %v446 = vsel %vm209, %v443, 0
    %448 = vmatpush.xpose.msra.mxu0 0.0
    %449 = vmatpush.xpose.msra.mxu0 0.0
    %450 = vmatpush.xpose.msra.mxu0 0.0
    %451 = vmatpush.xpose.msra.mxu0 0.0
    %452 = vmatpush.xpose.msra.mxu0 0.0
    %453 = vmatpush.xpose.msra.mxu0 0.0
    %454 = vmatpush.xpose.msra.mxu0 0.0
    %455 = vmatpush.xpose.msra.mxu0 0.0
    %456 = vmatpush.xpose.msra.mxu0 0.0
    %457 = vmatpush.xpose.msra.mxu0 0.0
    %458 = vmatpush.xpose.msra.mxu0 0.0
    %459 = vmatpush.xpose.msra.mxu0 0.0
    %460 = vmatpush.xpose.msra.mxu0 0.0
    %461 = vmatpush.xpose.msra.mxu0 0.0
    %462 = vmatpush.xpose.msra.mxu0 0.0
    %463 = vmatpush.xpose.msra.mxu0 %v446
    %464 = vmatmul.f32.gmra.mxu0 %v444
    %v465 = vpop.f32.mrf.mxu0
    %v466 = vadd.f32 0.0, %v465
    %467 = vdwg.mxu0
    %468 = vrot.lane.b32.xlu0 %v196, 96
    %v469 = vpop.permute.xlu0 %468
    %v470 = vsel %vm209, %v196, 0
    %v472 = vsel %vm209, %v469, 0
    %474 = vmatpush.xpose.msra.mxu0 0.0
    %475 = vmatpush.xpose.msra.mxu0 0.0
    %476 = vmatpush.xpose.msra.mxu0 0.0
    %477 = vmatpush.xpose.msra.mxu0 0.0
    %478 = vmatpush.xpose.msra.mxu0 0.0
    %479 = vmatpush.xpose.msra.mxu0 0.0
    %480 = vmatpush.xpose.msra.mxu0 0.0
    %481 = vmatpush.xpose.msra.mxu0 0.0
    %482 = vmatpush.xpose.msra.mxu0 0.0
    %483 = vmatpush.xpose.msra.mxu0 0.0
    %484 = vmatpush.xpose.msra.mxu0 0.0
    %485 = vmatpush.xpose.msra.mxu0 0.0
    %486 = vmatpush.xpose.msra.mxu0 0.0
    %487 = vmatpush.xpose.msra.mxu0 0.0
    %488 = vmatpush.xpose.msra.mxu0 0.0
    %489 = vmatpush.xpose.msra.mxu0 %v472
    %490 = vmatmul.f32.gmra.mxu0 %v470
    %v491 = vpop.f32.mrf.mxu0
    %v492 = vadd.f32 0.0, %v491
    %493 = vdwg.mxu0
    %494 = vrot.lane.b32.xlu0 %v198, 96
    %v495 = vpop.permute.xlu0 %494
    %v496 = vsel %vm209, %v198, 0
    %v498 = vsel %vm209, %v495, 0
    %500 = vmatpush.xpose.msra.mxu0 0.0
    %501 = vmatpush.xpose.msra.mxu0 0.0
    %502 = vmatpush.xpose.msra.mxu0 0.0
    %503 = vmatpush.xpose.msra.mxu0 0.0
    %504 = vmatpush.xpose.msra.mxu0 0.0
    %505 = vmatpush.xpose.msra.mxu0 0.0
    %506 = vmatpush.xpose.msra.mxu0 0.0
    %507 = vmatpush.xpose.msra.mxu0 0.0
    %508 = vmatpush.xpose.msra.mxu0 0.0
    %509 = vmatpush.xpose.msra.mxu0 0.0
    %510 = vmatpush.xpose.msra.mxu0 0.0
    %511 = vmatpush.xpose.msra.mxu0 0.0
    %512 = vmatpush.xpose.msra.mxu0 0.0
    %513 = vmatpush.xpose.msra.mxu0 0.0
    %514 = vmatpush.xpose.msra.mxu0 0.0
    %515 = vmatpush.xpose.msra.mxu0 %v498
    %516 = vmatmul.f32.gmra.mxu0 %v496
    %v517 = vpop.f32.mrf.mxu0
    %v518 = vadd.f32 0.0, %v517
    %519 = vdwg.mxu0
    %520 = vrot.lane.b32.xlu0 %v200, 96
    %v521 = vpop.permute.xlu0 %520
    %v522 = vsel %vm209, %v200, 0
    %v524 = vsel %vm209, %v521, 0
    %526 = vmatpush.xpose.msra.mxu0 0.0
    %527 = vmatpush.xpose.msra.mxu0 0.0
    %528 = vmatpush.xpose.msra.mxu0 0.0
    %529 = vmatpush.xpose.msra.mxu0 0.0
    %530 = vmatpush.xpose.msra.mxu0 0.0
    %531 = vmatpush.xpose.msra.mxu0 0.0
    %532 = vmatpush.xpose.msra.mxu0 0.0
    %533 = vmatpush.xpose.msra.mxu0 0.0
    %534 = vmatpush.xpose.msra.mxu0 0.0
    %535 = vmatpush.xpose.msra.mxu0 0.0
    %536 = vmatpush.xpose.msra.mxu0 0.0
    %537 = vmatpush.xpose.msra.mxu0 0.0
    %538 = vmatpush.xpose.msra.mxu0 0.0
    %539 = vmatpush.xpose.msra.mxu0 0.0
    %540 = vmatpush.xpose.msra.mxu0 0.0
    %541 = vmatpush.xpose.msra.mxu0 %v524
    %542 = vmatmul.f32.gmra.mxu0 %v522
    %v543 = vpop.f32.mrf.mxu0
    %v544 = vadd.f32 0.0, %v543
    %545 = vdwg.mxu0
    %546 = vrot.lane.b32.xlu0 %v202, 96
    %v547 = vpop.permute.xlu0 %546
    %v548 = vsel %vm209, %v202, 0
    %v550 = vsel %vm209, %v547, 0
    %552 = vmatpush.xpose.msra.mxu0 0.0
    %553 = vmatpush.xpose.msra.mxu0 0.0
    %554 = vmatpush.xpose.msra.mxu0 0.0
    %555 = vmatpush.xpose.msra.mxu0 0.0
    %556 = vmatpush.xpose.msra.mxu0 0.0
    %557 = vmatpush.xpose.msra.mxu0 0.0
    %558 = vmatpush.xpose.msra.mxu0 0.0
    %559 = vmatpush.xpose.msra.mxu0 0.0
    %560 = vmatpush.xpose.msra.mxu0 0.0
    %561 = vmatpush.xpose.msra.mxu0 0.0
    %562 = vmatpush.xpose.msra.mxu0 0.0
    %563 = vmatpush.xpose.msra.mxu0 0.0
    %564 = vmatpush.xpose.msra.mxu0 0.0
    %565 = vmatpush.xpose.msra.mxu0 0.0
    %566 = vmatpush.xpose.msra.mxu0 0.0
    %567 = vmatpush.xpose.msra.mxu0 %v550
    %568 = vmatmul.f32.gmra.mxu0 %v548
    %v569 = vpop.f32.mrf.mxu0
    %v570 = vadd.f32 0.0, %v569
    %571 = vdwg.mxu0
    %572 = vrot.lane.b32.xlu0 %v204, 96
    %v573 = vpop.permute.xlu0 %572
    %v574 = vsel %vm209, %v204, 0
    %v576 = vsel %vm209, %v573, 0
    %578 = vmatpush.xpose.msra.mxu0 0.0
    %579 = vmatpush.xpose.msra.mxu0 0.0
    %580 = vmatpush.xpose.msra.mxu0 0.0
    %581 = vmatpush.xpose.msra.mxu0 0.0
    %582 = vmatpush.xpose.msra.mxu0 0.0
    %583 = vmatpush.xpose.msra.mxu0 0.0
    %584 = vmatpush.xpose.msra.mxu0 0.0
    %585 = vmatpush.xpose.msra.mxu0 0.0
    %586 = vmatpush.xpose.msra.mxu0 0.0
    %587 = vmatpush.xpose.msra.mxu0 0.0
    %588 = vmatpush.xpose.msra.mxu0 0.0
    %589 = vmatpush.xpose.msra.mxu0 0.0
    %590 = vmatpush.xpose.msra.mxu0 0.0
    %591 = vmatpush.xpose.msra.mxu0 0.0
    %592 = vmatpush.xpose.msra.mxu0 0.0
    %593 = vmatpush.xpose.msra.mxu0 %v576
    %594 = vmatmul.f32.gmra.mxu0 %v574
    %v595 = vpop.f32.mrf.mxu0
    %v596 = vadd.f32 0.0, %v595
    %597 = vdwg.mxu0
    %598 = vrot.lane.b32.xlu0 %v206, 96
    %v599 = vpop.permute.xlu0 %598
    %v600 = vsel %vm209, %v206, 0
    %v602 = vsel %vm209, %v599, 0
    %604 = vmatpush.xpose.msra.mxu0 0.0
    %605 = vmatpush.xpose.msra.mxu0 0.0
    %606 = vmatpush.xpose.msra.mxu0 0.0
    %607 = vmatpush.xpose.msra.mxu0 0.0
    %608 = vmatpush.xpose.msra.mxu0 0.0
    %609 = vmatpush.xpose.msra.mxu0 0.0
    %610 = vmatpush.xpose.msra.mxu0 0.0
    %611 = vmatpush.xpose.msra.mxu0 0.0
    %612 = vmatpush.xpose.msra.mxu0 0.0
    %613 = vmatpush.xpose.msra.mxu0 0.0
    %614 = vmatpush.xpose.msra.mxu0 0.0
    %615 = vmatpush.xpose.msra.mxu0 0.0
    %616 = vmatpush.xpose.msra.mxu0 0.0
    %617 = vmatpush.xpose.msra.mxu0 0.0
    %618 = vmatpush.xpose.msra.mxu0 0.0
    %619 = vmatpush.xpose.msra.mxu0 %v602
    %620 = vmatmul.f32.gmra.mxu0 %v600
    %v621 = vpop.f32.mrf.mxu0
    %v622 = vadd.f32 0.0, %v621
    %623 = vdwg.mxu0
    %v624 = vsel %vm75, %v232, -inf
    %625 = vmax.xlane.f32.xlu0 %v624
    %v626 = vpop.xlane.xlu0 %625
    %v627 = vsel %vm75, %v258, -inf
    %628 = vmax.xlane.f32.xlu0 %v627
    %v629 = vpop.xlane.xlu0 %628
    %v630 = vsel %vm75, %v284, -inf
    %631 = vmax.xlane.f32.xlu0 %v630
    %v632 = vpop.xlane.xlu0 %631
    %v633 = vsel %vm75, %v310, -inf
    %634 = vmax.xlane.f32.xlu0 %v633
    %v635 = vpop.xlane.xlu0 %634
    %v636 = vsel %vm75, %v336, -inf
    %637 = vmax.xlane.f32.xlu0 %v636
    %v638 = vpop.xlane.xlu0 %637
    %v639 = vsel %vm75, %v362, -inf
    %640 = vmax.xlane.f32.xlu0 %v639
    %v641 = vpop.xlane.xlu0 %640
    %v642 = vsel %vm75, %v388, -inf
    %643 = vmax.xlane.f32.xlu0 %v642
    %v644 = vpop.xlane.xlu0 %643
    %v645 = vsel %vm75, %v414, -inf
    %646 = vmax.xlane.f32.xlu0 %v645
    %v647 = vpop.xlane.xlu0 %646
    %v648 = vsel %vm75, %v440, -inf
    %649 = vmax.xlane.f32.xlu0 %v648
    %v650 = vpop.xlane.xlu0 %649
    %v651 = vsel %vm75, %v466, -inf
    %652 = vmax.xlane.f32.xlu0 %v651
    %v653 = vpop.xlane.xlu0 %652
    %v654 = vsel %vm75, %v492, -inf
    %655 = vmax.xlane.f32.xlu0 %v654
    %v656 = vpop.xlane.xlu0 %655
    %v657 = vsel %vm75, %v518, -inf
    %658 = vmax.xlane.f32.xlu0 %v657
    %v659 = vpop.xlane.xlu0 %658
    %v660 = vsel %vm75, %v544, -inf
    %661 = vmax.xlane.f32.xlu0 %v660
    %v662 = vpop.xlane.xlu0 %661
    %v663 = vsel %vm75, %v570, -inf
    %664 = vmax.xlane.f32.xlu0 %v663
    %v665 = vpop.xlane.xlu0 %664
    %v666 = vsel %vm75, %v596, -inf
    %667 = vmax.xlane.f32.xlu0 %v666
    %v668 = vpop.xlane.xlu0 %667
    %v669 = vsel %vm75, %v622, -inf
    %670 = vmax.xlane.f32.xlu0 %v669
    %v671 = vpop.xlane.xlu0 %670
    %v672 = vsub.f32 %v232, %v626
    %v673 = vsub.f32 %v258, %v629
    %v674 = vsub.f32 %v284, %v632
    %v675 = vsub.f32 %v310, %v635
    %v676 = vsub.f32 %v336, %v638
    %v677 = vsub.f32 %v362, %v641
    %v678 = vsub.f32 %v388, %v644
    %v679 = vsub.f32 %v414, %v647
    %v680 = vsub.f32 %v440, %v650
    %v681 = vsub.f32 %v466, %v653
    %v682 = vsub.f32 %v492, %v656
    %v683 = vsub.f32 %v518, %v659
    %v684 = vsub.f32 %v544, %v662
    %v685 = vsub.f32 %v570, %v665
    %v686 = vsub.f32 %v596, %v668
    %v687 = vsub.f32 %v622, %v671
    %v688 = vmul.f32 %v672, 1.442695
    %v689 = vpow.pop %v688
    %v690 = vmul.f32 %v673, 1.442695
    %v691 = vpow.pop %v690
    %v692 = vmul.f32 %v674, 1.442695
    %v693 = vpow.pop %v692
    %v694 = vmul.f32 %v675, 1.442695
    %v695 = vpow.pop %v694
    %v696 = vmul.f32 %v676, 1.442695
    %v697 = vpow.pop %v696
    %v698 = vmul.f32 %v677, 1.442695
    %v699 = vpow.pop %v698
    %v700 = vmul.f32 %v678, 1.442695
    %v701 = vpow.pop %v700
    %v702 = vmul.f32 %v679, 1.442695
    %v703 = vpow.pop %v702
    %v704 = vmul.f32 %v680, 1.442695
    %v705 = vpow.pop %v704
    %v706 = vmul.f32 %v681, 1.442695
    %v707 = vpow.pop %v706
    %v708 = vmul.f32 %v682, 1.442695
    %v709 = vpow.pop %v708
    %v710 = vmul.f32 %v683, 1.442695
    %v711 = vpow.pop %v710
    %v712 = vmul.f32 %v684, 1.442695
    %v713 = vpow.pop %v712
    %v714 = vmul.f32 %v685, 1.442695
    %v715 = vpow.pop %v714
    %v716 = vmul.f32 %v686, 1.442695
    %v717 = vpow.pop %v716
    %v718 = vmul.f32 %v687, 1.442695
    %v719 = vpow.pop %v718
    %v720 = vsel %vm75, %v689, 0.0
    %721 = vadd.xlane.f32.xlu0 %v720
    %v722 = vpop.xlane.xlu0 %721
    %v723 = vsel %vm75, %v691, 0.0
    %724 = vadd.xlane.f32.xlu0 %v723
    %v725 = vpop.xlane.xlu0 %724
    %v726 = vsel %vm75, %v693, 0.0
    %727 = vadd.xlane.f32.xlu0 %v726
    %v728 = vpop.xlane.xlu0 %727
    %v729 = vsel %vm75, %v695, 0.0
    %730 = vadd.xlane.f32.xlu0 %v729
    %v731 = vpop.xlane.xlu0 %730
    %v732 = vsel %vm75, %v697, 0.0
    %733 = vadd.xlane.f32.xlu0 %v732
    %v734 = vpop.xlane.xlu0 %733
    %v735 = vsel %vm75, %v699, 0.0
    %736 = vadd.xlane.f32.xlu0 %v735
    %v737 = vpop.xlane.xlu0 %736
    %v738 = vsel %vm75, %v701, 0.0
    %739 = vadd.xlane.f32.xlu0 %v738
    %v740 = vpop.xlane.xlu0 %739
    %v741 = vsel %vm75, %v703, 0.0
    %742 = vadd.xlane.f32.xlu0 %v741
    %v743 = vpop.xlane.xlu0 %742
    %v744 = vsel %vm75, %v705, 0.0
    %745 = vadd.xlane.f32.xlu0 %v744
    %v746 = vpop.xlane.xlu0 %745
    %v747 = vsel %vm75, %v707, 0.0
    %748 = vadd.xlane.f32.xlu0 %v747
    %v749 = vpop.xlane.xlu0 %748
    %v750 = vsel %vm75, %v709, 0.0
    %751 = vadd.xlane.f32.xlu0 %v750
    %v752 = vpop.xlane.xlu0 %751
    %v753 = vsel %vm75, %v711, 0.0
    %754 = vadd.xlane.f32.xlu0 %v753
    %v755 = vpop.xlane.xlu0 %754
    %v756 = vsel %vm75, %v713, 0.0
    %757 = vadd.xlane.f32.xlu0 %v756
    %v758 = vpop.xlane.xlu0 %757
    %v759 = vsel %vm75, %v715, 0.0
    %760 = vadd.xlane.f32.xlu0 %v759
    %v761 = vpop.xlane.xlu0 %760
    %v762 = vsel %vm75, %v717, 0.0
    %763 = vadd.xlane.f32.xlu0 %v762
    %v764 = vpop.xlane.xlu0 %763
    %v765 = vsel %vm75, %v719, 0.0
    %766 = vadd.xlane.f32.xlu0 %v765
    %v767 = vpop.xlane.xlu0 %766
    %v768 = vrcp.pop %v722
    %v769 = vrcp.pop %v725
    %v770 = vrcp.pop %v728
    %v771 = vrcp.pop %v731
    %v772 = vrcp.pop %v734
    %v773 = vrcp.pop %v737
    %v774 = vrcp.pop %v740
    %v775 = vrcp.pop %v743
    %v776 = vrcp.pop %v746
    %v777 = vrcp.pop %v749
    %v778 = vrcp.pop %v752
    %v779 = vrcp.pop %v755
    %v780 = vrcp.pop %v758
    %v781 = vrcp.pop %v761
    %v782 = vrcp.pop %v764
    %v783 = vrcp.pop %v767
    %v784 = vmul.f32 %v689, %v768
    %v785 = vmul.f32 %v691, %v769
    %v786 = vmul.f32 %v693, %v770
    %v787 = vmul.f32 %v695, %v771
    %v788 = vmul.f32 %v697, %v772
    %v789 = vmul.f32 %v699, %v773
    %v790 = vmul.f32 %v701, %v774
    %v791 = vmul.f32 %v703, %v775
    %v792 = vmul.f32 %v705, %v776
    %v793 = vmul.f32 %v707, %v777
    %v794 = vmul.f32 %v709, %v778
    %v795 = vmul.f32 %v711, %v779
    %v796 = vmul.f32 %v713, %v780
    %v797 = vmul.f32 %v715, %v781
    %v798 = vmul.f32 %v717, %v782
    %v799 = vmul.f32 %v719, %v783
    %800 = vrot.lane.b32.xlu0 %v164, 64
    %v801 = vpop.permute.xlu0 %800
    %v804 = vsel %vm75, %v784, 0
    %806 = vmatpush.msra.mxu0 0.0
    %807 = vmatpush.msra.mxu0 0.0
    %808 = vmatpush.msra.mxu0 0.0
    %809 = vmatpush.msra.mxu0 0.0
    %810 = vmatpush.msra.mxu0 0.0
    %811 = vmatpush.msra.mxu0 0.0
    %812 = vmatpush.msra.mxu0 0.0
    %813 = vmatpush.msra.mxu0 0.0
    %814 = vmatpush.msra.mxu0 0.0
    %815 = vmatpush.msra.mxu0 0.0
    %816 = vmatpush.msra.mxu0 0.0
    %817 = vmatpush.msra.mxu0 0.0
    %818 = vmatpush.msra.mxu0 0.0
    %819 = vmatpush.msra.mxu0 0.0
    %820 = vmatpush.msra.mxu0 0.0
    %821 = vmatpush.msra.mxu0 %v801
    %822 = vmatmul.f32.gmra.mxu0 %v804
    %v823 = vpop.f32.mrf.mxu0
    %v824 = vadd.f32 0.0, %v823
    %825 = vdwg.mxu0
    %826 = vrot.lane.b32.xlu0 %v166, 64
    %v827 = vpop.permute.xlu0 %826
    %v830 = vsel %vm75, %v785, 0
    %832 = vmatpush.msra.mxu0 0.0
    %833 = vmatpush.msra.mxu0 0.0
    %834 = vmatpush.msra.mxu0 0.0
    %835 = vmatpush.msra.mxu0 0.0
    %836 = vmatpush.msra.mxu0 0.0
    %837 = vmatpush.msra.mxu0 0.0
    %838 = vmatpush.msra.mxu0 0.0
    %839 = vmatpush.msra.mxu0 0.0
    %840 = vmatpush.msra.mxu0 0.0
    %841 = vmatpush.msra.mxu0 0.0
    %842 = vmatpush.msra.mxu0 0.0
    %843 = vmatpush.msra.mxu0 0.0
    %844 = vmatpush.msra.mxu0 0.0
    %845 = vmatpush.msra.mxu0 0.0
    %846 = vmatpush.msra.mxu0 0.0
    %847 = vmatpush.msra.mxu0 %v827
    %848 = vmatmul.f32.gmra.mxu0 %v830
    %v849 = vpop.f32.mrf.mxu0
    %v850 = vadd.f32 0.0, %v849
    %851 = vdwg.mxu0
    %852 = vrot.lane.b32.xlu0 %v169, 64
    %v853 = vpop.permute.xlu0 %852
    %v856 = vsel %vm75, %v786, 0
    %858 = vmatpush.msra.mxu0 0.0
    %859 = vmatpush.msra.mxu0 0.0
    %860 = vmatpush.msra.mxu0 0.0
    %861 = vmatpush.msra.mxu0 0.0
    %862 = vmatpush.msra.mxu0 0.0
    %863 = vmatpush.msra.mxu0 0.0
    %864 = vmatpush.msra.mxu0 0.0
    %865 = vmatpush.msra.mxu0 0.0
    %866 = vmatpush.msra.mxu0 0.0
    %867 = vmatpush.msra.mxu0 0.0
    %868 = vmatpush.msra.mxu0 0.0
    %869 = vmatpush.msra.mxu0 0.0
    %870 = vmatpush.msra.mxu0 0.0
    %871 = vmatpush.msra.mxu0 0.0
    %872 = vmatpush.msra.mxu0 0.0
    %873 = vmatpush.msra.mxu0 %v853
    %874 = vmatmul.f32.gmra.mxu0 %v856
    %v875 = vpop.f32.mrf.mxu0
    %v876 = vadd.f32 0.0, %v875
    %877 = vdwg.mxu0
    %878 = vrot.lane.b32.xlu0 %v171, 64
    %v879 = vpop.permute.xlu0 %878
    %v882 = vsel %vm75, %v787, 0
    %884 = vmatpush.msra.mxu0 0.0
    %885 = vmatpush.msra.mxu0 0.0
    %886 = vmatpush.msra.mxu0 0.0
    %887 = vmatpush.msra.mxu0 0.0
    %888 = vmatpush.msra.mxu0 0.0
    %889 = vmatpush.msra.mxu0 0.0
    %890 = vmatpush.msra.mxu0 0.0
    %891 = vmatpush.msra.mxu0 0.0
    %892 = vmatpush.msra.mxu0 0.0
    %893 = vmatpush.msra.mxu0 0.0
    %894 = vmatpush.msra.mxu0 0.0
    %895 = vmatpush.msra.mxu0 0.0
    %896 = vmatpush.msra.mxu0 0.0
    %897 = vmatpush.msra.mxu0 0.0
    %898 = vmatpush.msra.mxu0 0.0
    %899 = vmatpush.msra.mxu0 %v879
    %900 = vmatmul.f32.gmra.mxu0 %v882
    %v901 = vpop.f32.mrf.mxu0
    %v902 = vadd.f32 0.0, %v901
    %903 = vdwg.mxu0
    %904 = vrot.lane.b32.xlu0 %v174, 64
    %v905 = vpop.permute.xlu0 %904
    %v908 = vsel %vm75, %v788, 0
    %910 = vmatpush.msra.mxu0 0.0
    %911 = vmatpush.msra.mxu0 0.0
    %912 = vmatpush.msra.mxu0 0.0
    %913 = vmatpush.msra.mxu0 0.0
    %914 = vmatpush.msra.mxu0 0.0
    %915 = vmatpush.msra.mxu0 0.0
    %916 = vmatpush.msra.mxu0 0.0
    %917 = vmatpush.msra.mxu0 0.0
    %918 = vmatpush.msra.mxu0 0.0
    %919 = vmatpush.msra.mxu0 0.0
    %920 = vmatpush.msra.mxu0 0.0
    %921 = vmatpush.msra.mxu0 0.0
    %922 = vmatpush.msra.mxu0 0.0
    %923 = vmatpush.msra.mxu0 0.0
    %924 = vmatpush.msra.mxu0 0.0
    %925 = vmatpush.msra.mxu0 %v905
    %926 = vmatmul.f32.gmra.mxu0 %v908
    %v927 = vpop.f32.mrf.mxu0
    %v928 = vadd.f32 0.0, %v927
    %929 = vdwg.mxu0
    %930 = vrot.lane.b32.xlu0 %v176, 64
    %v931 = vpop.permute.xlu0 %930
    %v934 = vsel %vm75, %v789, 0
    %936 = vmatpush.msra.mxu0 0.0
    %937 = vmatpush.msra.mxu0 0.0
    %938 = vmatpush.msra.mxu0 0.0
    %939 = vmatpush.msra.mxu0 0.0
    %940 = vmatpush.msra.mxu0 0.0
    %941 = vmatpush.msra.mxu0 0.0
    %942 = vmatpush.msra.mxu0 0.0
    %943 = vmatpush.msra.mxu0 0.0
    %944 = vmatpush.msra.mxu0 0.0
    %945 = vmatpush.msra.mxu0 0.0
    %946 = vmatpush.msra.mxu0 0.0
    %947 = vmatpush.msra.mxu0 0.0
    %948 = vmatpush.msra.mxu0 0.0
    %949 = vmatpush.msra.mxu0 0.0
    %950 = vmatpush.msra.mxu0 0.0
    %951 = vmatpush.msra.mxu0 %v931
    %952 = vmatmul.f32.gmra.mxu0 %v934
    %v953 = vpop.f32.mrf.mxu0
    %v954 = vadd.f32 0.0, %v953
    %955 = vdwg.mxu0
    %956 = vrot.lane.b32.xlu0 %v179, 64
    %v957 = vpop.permute.xlu0 %956
    %v960 = vsel %vm75, %v790, 0
    %962 = vmatpush.msra.mxu0 0.0
    %963 = vmatpush.msra.mxu0 0.0
    %964 = vmatpush.msra.mxu0 0.0
    %965 = vmatpush.msra.mxu0 0.0
    %966 = vmatpush.msra.mxu0 0.0
    %967 = vmatpush.msra.mxu0 0.0
    %968 = vmatpush.msra.mxu0 0.0
    %969 = vmatpush.msra.mxu0 0.0
    %970 = vmatpush.msra.mxu0 0.0
    %971 = vmatpush.msra.mxu0 0.0
    %972 = vmatpush.msra.mxu0 0.0
    %973 = vmatpush.msra.mxu0 0.0
    %974 = vmatpush.msra.mxu0 0.0
    %975 = vmatpush.msra.mxu0 0.0
    %976 = vmatpush.msra.mxu0 0.0
    %977 = vmatpush.msra.mxu0 %v957
    %978 = vmatmul.f32.gmra.mxu0 %v960
    %v979 = vpop.f32.mrf.mxu0
    %v980 = vadd.f32 0.0, %v979
    %981 = vdwg.mxu0
    %982 = vrot.lane.b32.xlu0 %v181, 64
    %v983 = vpop.permute.xlu0 %982
    %v986 = vsel %vm75, %v791, 0
    %988 = vmatpush.msra.mxu0 0.0
    %989 = vmatpush.msra.mxu0 0.0
    %990 = vmatpush.msra.mxu0 0.0
    %991 = vmatpush.msra.mxu0 0.0
    %992 = vmatpush.msra.mxu0 0.0
    %993 = vmatpush.msra.mxu0 0.0
    %994 = vmatpush.msra.mxu0 0.0
    %995 = vmatpush.msra.mxu0 0.0
    %996 = vmatpush.msra.mxu0 0.0
    %997 = vmatpush.msra.mxu0 0.0
    %998 = vmatpush.msra.mxu0 0.0
    %999 = vmatpush.msra.mxu0 0.0
    %1000 = vmatpush.msra.mxu0 0.0
    %1001 = vmatpush.msra.mxu0 0.0
    %1002 = vmatpush.msra.mxu0 0.0
    %1003 = vmatpush.msra.mxu0 %v983
    %1004 = vmatmul.f32.gmra.mxu0 %v986
    %v1005 = vpop.f32.mrf.mxu0
    %v1006 = vadd.f32 0.0, %v1005
    %1007 = vdwg.mxu0
    %1008 = vrot.lane.b32.xlu0 %v192, 64
    %v1009 = vpop.permute.xlu0 %1008
    %v1012 = vsel %vm75, %v792, 0
    %1014 = vmatpush.msra.mxu0 0.0
    %1015 = vmatpush.msra.mxu0 0.0
    %1016 = vmatpush.msra.mxu0 0.0
    %1017 = vmatpush.msra.mxu0 0.0
    %1018 = vmatpush.msra.mxu0 0.0
    %1019 = vmatpush.msra.mxu0 0.0
    %1020 = vmatpush.msra.mxu0 0.0
    %1021 = vmatpush.msra.mxu0 0.0
    %1022 = vmatpush.msra.mxu0 0.0
    %1023 = vmatpush.msra.mxu0 0.0
    %1024 = vmatpush.msra.mxu0 0.0
    %1025 = vmatpush.msra.mxu0 0.0
    %1026 = vmatpush.msra.mxu0 0.0
    %1027 = vmatpush.msra.mxu0 0.0
    %1028 = vmatpush.msra.mxu0 0.0
    %1029 = vmatpush.msra.mxu0 %v1009
    %1030 = vmatmul.f32.gmra.mxu0 %v1012
    %v1031 = vpop.f32.mrf.mxu0
    %v1032 = vadd.f32 0.0, %v1031
    %1033 = vdwg.mxu0
    %1034 = vrot.lane.b32.xlu0 %v194, 64
    %v1035 = vpop.permute.xlu0 %1034
    %v1038 = vsel %vm75, %v793, 0
    %1040 = vmatpush.msra.mxu0 0.0
    %1041 = vmatpush.msra.mxu0 0.0
    %1042 = vmatpush.msra.mxu0 0.0
    %1043 = vmatpush.msra.mxu0 0.0
    %1044 = vmatpush.msra.mxu0 0.0
    %1045 = vmatpush.msra.mxu0 0.0
    %1046 = vmatpush.msra.mxu0 0.0
    %1047 = vmatpush.msra.mxu0 0.0
    %1048 = vmatpush.msra.mxu0 0.0
    %1049 = vmatpush.msra.mxu0 0.0
    %1050 = vmatpush.msra.mxu0 0.0
    %1051 = vmatpush.msra.mxu0 0.0
    %1052 = vmatpush.msra.mxu0 0.0
    %1053 = vmatpush.msra.mxu0 0.0
    %1054 = vmatpush.msra.mxu0 0.0
    %1055 = vmatpush.msra.mxu0 %v1035
    %1056 = vmatmul.f32.gmra.mxu0 %v1038
    %v1057 = vpop.f32.mrf.mxu0
    %v1058 = vadd.f32 0.0, %v1057
    %1059 = vdwg.mxu0
    %1060 = vrot.lane.b32.xlu0 %v196, 64
    %v1061 = vpop.permute.xlu0 %1060
    %v1064 = vsel %vm75, %v794, 0
    %1066 = vmatpush.msra.mxu0 0.0
    %1067 = vmatpush.msra.mxu0 0.0
    %1068 = vmatpush.msra.mxu0 0.0
    %1069 = vmatpush.msra.mxu0 0.0
    %1070 = vmatpush.msra.mxu0 0.0
    %1071 = vmatpush.msra.mxu0 0.0
    %1072 = vmatpush.msra.mxu0 0.0
    %1073 = vmatpush.msra.mxu0 0.0
    %1074 = vmatpush.msra.mxu0 0.0
    %1075 = vmatpush.msra.mxu0 0.0
    %1076 = vmatpush.msra.mxu0 0.0
    %1077 = vmatpush.msra.mxu0 0.0
    %1078 = vmatpush.msra.mxu0 0.0
    %1079 = vmatpush.msra.mxu0 0.0
    %1080 = vmatpush.msra.mxu0 0.0
    %1081 = vmatpush.msra.mxu0 %v1061
    %1082 = vmatmul.f32.gmra.mxu0 %v1064
    %v1083 = vpop.f32.mrf.mxu0
    %v1084 = vadd.f32 0.0, %v1083
    %1085 = vdwg.mxu0
    %1086 = vrot.lane.b32.xlu0 %v198, 64
    %v1087 = vpop.permute.xlu0 %1086
    %v1090 = vsel %vm75, %v795, 0
    %1092 = vmatpush.msra.mxu0 0.0
    %1093 = vmatpush.msra.mxu0 0.0
    %1094 = vmatpush.msra.mxu0 0.0
    %1095 = vmatpush.msra.mxu0 0.0
    %1096 = vmatpush.msra.mxu0 0.0
    %1097 = vmatpush.msra.mxu0 0.0
    %1098 = vmatpush.msra.mxu0 0.0
    %1099 = vmatpush.msra.mxu0 0.0
    %1100 = vmatpush.msra.mxu0 0.0
    %1101 = vmatpush.msra.mxu0 0.0
    %1102 = vmatpush.msra.mxu0 0.0
    %1103 = vmatpush.msra.mxu0 0.0
    %1104 = vmatpush.msra.mxu0 0.0
    %1105 = vmatpush.msra.mxu0 0.0
    %1106 = vmatpush.msra.mxu0 0.0
    %1107 = vmatpush.msra.mxu0 %v1087
    %1108 = vmatmul.f32.gmra.mxu0 %v1090
    %v1109 = vpop.f32.mrf.mxu0
    %v1110 = vadd.f32 0.0, %v1109
    %1111 = vdwg.mxu0
    %1112 = vrot.lane.b32.xlu0 %v200, 64
    %v1113 = vpop.permute.xlu0 %1112
    %v1116 = vsel %vm75, %v796, 0
    %1118 = vmatpush.msra.mxu0 0.0
    %1119 = vmatpush.msra.mxu0 0.0
    %1120 = vmatpush.msra.mxu0 0.0
    %1121 = vmatpush.msra.mxu0 0.0
    %1122 = vmatpush.msra.mxu0 0.0
    %1123 = vmatpush.msra.mxu0 0.0
    %1124 = vmatpush.msra.mxu0 0.0
    %1125 = vmatpush.msra.mxu0 0.0
    %1126 = vmatpush.msra.mxu0 0.0
    %1127 = vmatpush.msra.mxu0 0.0
    %1128 = vmatpush.msra.mxu0 0.0
    %1129 = vmatpush.msra.mxu0 0.0
    %1130 = vmatpush.msra.mxu0 0.0
    %1131 = vmatpush.msra.mxu0 0.0
    %1132 = vmatpush.msra.mxu0 0.0
    %1133 = vmatpush.msra.mxu0 %v1113
    %1134 = vmatmul.f32.gmra.mxu0 %v1116
    %v1135 = vpop.f32.mrf.mxu0
    %v1136 = vadd.f32 0.0, %v1135
    %1137 = vdwg.mxu0
    %1138 = vrot.lane.b32.xlu0 %v202, 64
    %v1139 = vpop.permute.xlu0 %1138
    %v1142 = vsel %vm75, %v797, 0
    %1144 = vmatpush.msra.mxu0 0.0
    %1145 = vmatpush.msra.mxu0 0.0
    %1146 = vmatpush.msra.mxu0 0.0
    %1147 = vmatpush.msra.mxu0 0.0
    %1148 = vmatpush.msra.mxu0 0.0
    %1149 = vmatpush.msra.mxu0 0.0
    %1150 = vmatpush.msra.mxu0 0.0
    %1151 = vmatpush.msra.mxu0 0.0
    %1152 = vmatpush.msra.mxu0 0.0
    %1153 = vmatpush.msra.mxu0 0.0
    %1154 = vmatpush.msra.mxu0 0.0
    %1155 = vmatpush.msra.mxu0 0.0
    %1156 = vmatpush.msra.mxu0 0.0
    %1157 = vmatpush.msra.mxu0 0.0
    %1158 = vmatpush.msra.mxu0 0.0
    %1159 = vmatpush.msra.mxu0 %v1139
    %1160 = vmatmul.f32.gmra.mxu0 %v1142
    %v1161 = vpop.f32.mrf.mxu0
    %v1162 = vadd.f32 0.0, %v1161
    %1163 = vdwg.mxu0
    %1164 = vrot.lane.b32.xlu0 %v204, 64
    %v1165 = vpop.permute.xlu0 %1164
    %v1168 = vsel %vm75, %v798, 0
    %1170 = vmatpush.msra.mxu0 0.0
    %1171 = vmatpush.msra.mxu0 0.0
    %1172 = vmatpush.msra.mxu0 0.0
    %1173 = vmatpush.msra.mxu0 0.0
    %1174 = vmatpush.msra.mxu0 0.0
    %1175 = vmatpush.msra.mxu0 0.0
    %1176 = vmatpush.msra.mxu0 0.0
    %1177 = vmatpush.msra.mxu0 0.0
    %1178 = vmatpush.msra.mxu0 0.0
    %1179 = vmatpush.msra.mxu0 0.0
    %1180 = vmatpush.msra.mxu0 0.0
    %1181 = vmatpush.msra.mxu0 0.0
    %1182 = vmatpush.msra.mxu0 0.0
    %1183 = vmatpush.msra.mxu0 0.0
    %1184 = vmatpush.msra.mxu0 0.0
    %1185 = vmatpush.msra.mxu0 %v1165
    %1186 = vmatmul.f32.gmra.mxu0 %v1168
    %v1187 = vpop.f32.mrf.mxu0
    %v1188 = vadd.f32 0.0, %v1187
    %1189 = vdwg.mxu0
    %1190 = vrot.lane.b32.xlu0 %v206, 64
    %v1191 = vpop.permute.xlu0 %1190
    %v1194 = vsel %vm75, %v799, 0
    %1196 = vmatpush.msra.mxu0 0.0
    %1197 = vmatpush.msra.mxu0 0.0
    %1198 = vmatpush.msra.mxu0 0.0
    %1199 = vmatpush.msra.mxu0 0.0
    %1200 = vmatpush.msra.mxu0 0.0
    %1201 = vmatpush.msra.mxu0 0.0
    %1202 = vmatpush.msra.mxu0 0.0
    %1203 = vmatpush.msra.mxu0 0.0
    %1204 = vmatpush.msra.mxu0 0.0
    %1205 = vmatpush.msra.mxu0 0.0
    %1206 = vmatpush.msra.mxu0 0.0
    %1207 = vmatpush.msra.mxu0 0.0
    %1208 = vmatpush.msra.mxu0 0.0
    %1209 = vmatpush.msra.mxu0 0.0
    %1210 = vmatpush.msra.mxu0 0.0
    %1211 = vmatpush.msra.mxu0 %v1191
    %1212 = vmatmul.f32.gmra.mxu0 %v1194
    %v1213 = vpop.f32.mrf.mxu0
    %v1214 = vadd.f32 0.0, %v1213
    %1215 = vdwg.mxu0
    %1224 = vrot.lane.b32.xlu0 %v1032, 16
    %v1225 = vpop.permute.xlu0 %1224
    %1226 = vrot.lane.b32.xlu0 %v1058, 16
    %v1227 = vpop.permute.xlu0 %1226
    %1228 = vrot.lane.b32.xlu0 %v1084, 16
    %v1229 = vpop.permute.xlu0 %1228
    %1230 = vrot.lane.b32.xlu0 %v1110, 16
    %v1231 = vpop.permute.xlu0 %1230
    %1232 = vrot.lane.b32.xlu0 %v1136, 16
    %v1233 = vpop.permute.xlu0 %1232
    %1234 = vrot.lane.b32.xlu0 %v1162, 16
    %v1235 = vpop.permute.xlu0 %1234
    %1236 = vrot.lane.b32.xlu0 %v1188, 16
    %v1237 = vpop.permute.xlu0 %1236
    %1238 = vrot.lane.b32.xlu0 %v1214, 16
    %v1239 = vpop.permute.xlu0 %1238
    %v1248 = vsel %vm209, %v824, %v1225
    %v1249 = vsel %vm209, %v850, %v1227
    %v1250 = vsel %vm209, %v876, %v1229
    %v1251 = vsel %vm209, %v902, %v1231
    %v1252 = vsel %vm209, %v928, %v1233
    %v1253 = vsel %vm209, %v954, %v1235
    %v1254 = vsel %vm209, %v980, %v1237
    %v1255 = vsel %vm209, %v1006, %v1239
    %v1256 = vpack.c.bf16 %v1249, %v1248
    %v1257 = vpack.c.bf16 %v1251, %v1250
    %v1258 = vpack.c.bf16 %v1253, %v1252
    %v1259 = vpack.c.bf16 %v1255, %v1254
    %v1260 = vld [vmem:[%s3] sm:$0xf]
    %v1261 = vld [vmem:[%s3 + $0x4] sm:$0xf]
    %v1262 = vld [vmem:[%s3 + $0x8] sm:$0xf]
    %v1263 = vld [vmem:[%s3 + $0xc] sm:$0xf]
    %v1268 = vunpack.c.l.b16 %v1260
    %v1269 = vunpack.c.l.b16 %v1261
    %v1270 = vunpack.c.l.b16 %v1262
    %v1271 = vunpack.c.l.b16 %v1263
    %v1272 = vpack.c.b16 %v1269, %v1268
    %v1273 = vpack.c.b16 %v1271, %v1270
    %v1277 = vsel %vm141, %v1256, 0
    %v1280 = vsel %vm141, %v1257, 0
    %v1283 = vsel %vm141, %v1258, 0
    %v1286 = vsel %vm141, %v1259, 0
    %1288 = vmatpush.bf16.msra.mxu0 0
    %1289 = vmatpush.bf16.msra.mxu0 0
    %1290 = vmatpush.bf16.msra.mxu0 0
    %1291 = vmatpush.bf16.msra.mxu0 0
    %1292 = vmatpush.bf16.msra.mxu0 0
    %1293 = vmatpush.bf16.msra.mxu0 0
    %1294 = vmatpush.bf16.msra.mxu0 %v1273
    %1295 = vmatpush.bf16.msra.mxu0 %v1272
    %1296 = vmatmul.bf16.gmra.mxu0 %v1277
    %v1297 = vpop.f32.mrf.mxu0
    %v1298 = vadd.f32 %v36, %v1297
    %v1299 = vpop.f32.mrf.mxu0
    %v1300 = vadd.f32 %v36, %v1299
    %1301 = vmatmul.bf16.gmra.mxu0 %v1280
    %v1302 = vpop.f32.mrf.mxu0
    %v1303 = vadd.f32 %v36, %v1302
    %v1304 = vpop.f32.mrf.mxu0
    %v1305 = vadd.f32 %v36, %v1304
    %1306 = vmatmul.bf16.gmra.mxu0 %v1283
    %v1307 = vpop.f32.mrf.mxu0
    %v1308 = vadd.f32 %v36, %v1307
    %v1309 = vpop.f32.mrf.mxu0
    %v1310 = vadd.f32 %v36, %v1309
    %1311 = vmatmul.bf16.gmra.mxu0 %v1286
    %v1312 = vpop.f32.mrf.mxu0
    %v1313 = vadd.f32 %v36, %v1312
    %v1314 = vpop.f32.mrf.mxu0
    %v1315 = vadd.f32 %v36, %v1314
    %1316 = vdwg.mxu0
    %v1317 = vadd.f32 %v102, %v1298
    %v1318 = vadd.f32 %v104, %v1300
    %v1319 = vadd.f32 %v107, %v1303
    %v1320 = vadd.f32 %v109, %v1305
    %v1321 = vadd.f32 %v112, %v1308
    %v1322 = vadd.f32 %v114, %v1310
    %v1323 = vadd.f32 %v117, %v1313
    %v1324 = vadd.f32 %v119, %v1315
    %v1325 = vsel %vm141, %v1317, 0.0
    %1326 = vadd.xlane.f32.xlu0 %v1325
    %v1327 = vpop.xlane.xlu0 %1326
    %v1328 = vsel %vm141, %v1318, 0.0
    %1329 = vadd.xlane.f32.xlu0 %v1328
    %v1330 = vpop.xlane.xlu0 %1329
    %v1331 = vsel %vm141, %v1319, 0.0
    %1332 = vadd.xlane.f32.xlu0 %v1331
    %v1333 = vpop.xlane.xlu0 %1332
    %v1334 = vsel %vm141, %v1320, 0.0
    %1335 = vadd.xlane.f32.xlu0 %v1334
    %v1336 = vpop.xlane.xlu0 %1335
    %v1337 = vsel %vm141, %v1321, 0.0
    %1338 = vadd.xlane.f32.xlu0 %v1337
    %v1339 = vpop.xlane.xlu0 %1338
    %v1340 = vsel %vm141, %v1322, 0.0
    %1341 = vadd.xlane.f32.xlu0 %v1340
    %v1342 = vpop.xlane.xlu0 %1341
    %v1343 = vsel %vm141, %v1323, 0.0
    %1344 = vadd.xlane.f32.xlu0 %v1343
    %v1345 = vpop.xlane.xlu0 %1344
    %v1346 = vsel %vm141, %v1324, 0.0
    %1347 = vadd.xlane.f32.xlu0 %v1346
    %v1348 = vpop.xlane.xlu0 %1347
    %v1349 = vrcp.pop 32.0
    %v1350 = vmul.f32 32.0, %v1349
    %v1351 = vsub.f32 1.0, %v1350
    %v1352 = vmul.f32 %v1349, %v1351
    %v1353 = vadd.f32 %v1349, %v1352
    %vm1354 = vweird.f32 %v1349
    %v1355 = vsel %vm1354, %v1349, %v1353
    %v1356 = vmul.f32 %v1327, %v1355
    %v1357 = vmul.f32 %v1330, %v1355
    %v1358 = vmul.f32 %v1333, %v1355
    %v1359 = vmul.f32 %v1336, %v1355
    %v1360 = vmul.f32 %v1339, %v1355
    %v1361 = vmul.f32 %v1342, %v1355
    %v1362 = vmul.f32 %v1345, %v1355
    %v1363 = vmul.f32 %v1348, %v1355
    %v1364 = vsub.f32 %v1317, %v1356
    %v1365 = vsub.f32 %v1318, %v1357
    %v1366 = vsub.f32 %v1319, %v1358
    %v1367 = vsub.f32 %v1320, %v1359
    %v1368 = vsub.f32 %v1321, %v1360
    %v1369 = vsub.f32 %v1322, %v1361
    %v1370 = vsub.f32 %v1323, %v1362
    %v1371 = vsub.f32 %v1324, %v1363
    %v1372 = vmul.f32 %v1364, %v1364
    %v1373 = vmul.f32 %v1365, %v1365
    %v1374 = vmul.f32 %v1366, %v1366
    %v1375 = vmul.f32 %v1367, %v1367
    %v1376 = vmul.f32 %v1368, %v1368
    %v1377 = vmul.f32 %v1369, %v1369
    %v1378 = vmul.f32 %v1370, %v1370
    %v1379 = vmul.f32 %v1371, %v1371
    %v1380 = vsel %vm141, %v1372, 0.0
    %1381 = vadd.xlane.f32.xlu0 %v1380
    %v1382 = vpop.xlane.xlu0 %1381
    %v1383 = vsel %vm141, %v1373, 0.0
    %1384 = vadd.xlane.f32.xlu0 %v1383
    %v1385 = vpop.xlane.xlu0 %1384
    %v1386 = vsel %vm141, %v1374, 0.0
    %1387 = vadd.xlane.f32.xlu0 %v1386
    %v1388 = vpop.xlane.xlu0 %1387
    %v1389 = vsel %vm141, %v1375, 0.0
    %1390 = vadd.xlane.f32.xlu0 %v1389
    %v1391 = vpop.xlane.xlu0 %1390
    %v1392 = vsel %vm141, %v1376, 0.0
    %1393 = vadd.xlane.f32.xlu0 %v1392
    %v1394 = vpop.xlane.xlu0 %1393
    %v1395 = vsel %vm141, %v1377, 0.0
    %1396 = vadd.xlane.f32.xlu0 %v1395
    %v1397 = vpop.xlane.xlu0 %1396
    %v1398 = vsel %vm141, %v1378, 0.0
    %1399 = vadd.xlane.f32.xlu0 %v1398
    %v1400 = vpop.xlane.xlu0 %1399
    %v1401 = vsel %vm141, %v1379, 0.0
    %1402 = vadd.xlane.f32.xlu0 %v1401
    %v1403 = vpop.xlane.xlu0 %1402
    %v1404 = vmul.f32 %v1382, %v1355
    %v1405 = vmul.f32 %v1385, %v1355
    %v1406 = vmul.f32 %v1388, %v1355
    %v1407 = vmul.f32 %v1391, %v1355
    %v1408 = vmul.f32 %v1394, %v1355
    %v1409 = vmul.f32 %v1397, %v1355
    %v1410 = vmul.f32 %v1400, %v1355
    %v1411 = vmul.f32 %v1403, %v1355
    %v1412 = vadd.f32 %v1404, 1e-05
    %v1413 = vadd.f32 %v1405, 1e-05
    %v1414 = vadd.f32 %v1406, 1e-05
    %v1415 = vadd.f32 %v1407, 1e-05
    %v1416 = vadd.f32 %v1408, 1e-05
    %v1417 = vadd.f32 %v1409, 1e-05
    %v1418 = vadd.f32 %v1410, 1e-05
    %v1419 = vadd.f32 %v1411, 1e-05
    %v1420 = vrsqrt.pop %v1412
    %v1421 = vmul.f32 %v1420, %v1412
    %v1422 = vmul.f32 %v1421, %v1420
    %v1423 = vmul.f32 0.5, %v1422
    %v1424 = vsub.f32 1.5, %v1423
    %v1425 = vmul.f32 %v1420, %v1424
    %vm1426 = vweird.f32 %v1412
    %vm1427 = vweird.f32 %v1420
    %vm1428 = vmor %vm1426, %vm1427
    %v1429 = vsel %vm1428, %v1420, %v1425
    %v1430 = vrsqrt.pop %v1413
    %v1431 = vmul.f32 %v1430, %v1413
    %v1432 = vmul.f32 %v1431, %v1430
    %v1433 = vmul.f32 0.5, %v1432
    %v1434 = vsub.f32 1.5, %v1433
    %v1435 = vmul.f32 %v1430, %v1434
    %vm1436 = vweird.f32 %v1413
    %vm1437 = vweird.f32 %v1430
    %vm1438 = vmor %vm1436, %vm1437
    %v1439 = vsel %vm1438, %v1430, %v1435
    %v1440 = vrsqrt.pop %v1414
    %v1441 = vmul.f32 %v1440, %v1414
    %v1442 = vmul.f32 %v1441, %v1440
    %v1443 = vmul.f32 0.5, %v1442
    %v1444 = vsub.f32 1.5, %v1443
    %v1445 = vmul.f32 %v1440, %v1444
    %vm1446 = vweird.f32 %v1414
    %vm1447 = vweird.f32 %v1440
    %vm1448 = vmor %vm1446, %vm1447
    %v1449 = vsel %vm1448, %v1440, %v1445
    %v1450 = vrsqrt.pop %v1415
    %v1451 = vmul.f32 %v1450, %v1415
    %v1452 = vmul.f32 %v1451, %v1450
    %v1453 = vmul.f32 0.5, %v1452
    %v1454 = vsub.f32 1.5, %v1453
    %v1455 = vmul.f32 %v1450, %v1454
    %vm1456 = vweird.f32 %v1415
    %vm1457 = vweird.f32 %v1450
    %vm1458 = vmor %vm1456, %vm1457
    %v1459 = vsel %vm1458, %v1450, %v1455
    %v1460 = vrsqrt.pop %v1416
    %v1461 = vmul.f32 %v1460, %v1416
    %v1462 = vmul.f32 %v1461, %v1460
    %v1463 = vmul.f32 0.5, %v1462
    %v1464 = vsub.f32 1.5, %v1463
    %v1465 = vmul.f32 %v1460, %v1464
    %vm1466 = vweird.f32 %v1416
    %vm1467 = vweird.f32 %v1460
    %vm1468 = vmor %vm1466, %vm1467
    %v1469 = vsel %vm1468, %v1460, %v1465
    %v1470 = vrsqrt.pop %v1417
    %v1471 = vmul.f32 %v1470, %v1417
    %v1472 = vmul.f32 %v1471, %v1470
    %v1473 = vmul.f32 0.5, %v1472
    %v1474 = vsub.f32 1.5, %v1473
    %v1475 = vmul.f32 %v1470, %v1474
    %vm1476 = vweird.f32 %v1417
    %vm1477 = vweird.f32 %v1470
    %vm1478 = vmor %vm1476, %vm1477
    %v1479 = vsel %vm1478, %v1470, %v1475
    %v1480 = vrsqrt.pop %v1418
    %v1481 = vmul.f32 %v1480, %v1418
    %v1482 = vmul.f32 %v1481, %v1480
    %v1483 = vmul.f32 0.5, %v1482
    %v1484 = vsub.f32 1.5, %v1483
    %v1485 = vmul.f32 %v1480, %v1484
    %vm1486 = vweird.f32 %v1418
    %vm1487 = vweird.f32 %v1480
    %vm1488 = vmor %vm1486, %vm1487
    %v1489 = vsel %vm1488, %v1480, %v1485
    %v1490 = vrsqrt.pop %v1419
    %v1491 = vmul.f32 %v1490, %v1419
    %v1492 = vmul.f32 %v1491, %v1490
    %v1493 = vmul.f32 0.5, %v1492
    %v1494 = vsub.f32 1.5, %v1493
    %v1495 = vmul.f32 %v1490, %v1494
    %vm1496 = vweird.f32 %v1419
    %vm1497 = vweird.f32 %v1490
    %vm1498 = vmor %vm1496, %vm1497
    %v1499 = vsel %vm1498, %v1490, %v1495
    %v1500 = vmul.f32 %v1364, %v1429
    %v1501 = vmul.f32 %v1365, %v1439
    %v1502 = vmul.f32 %v1366, %v1449
    %v1503 = vmul.f32 %v1367, %v1459
    %v1504 = vmul.f32 %v1368, %v1469
    %v1505 = vmul.f32 %v1369, %v1479
    %v1506 = vmul.f32 %v1370, %v1489
    %v1507 = vmul.f32 %v1371, %v1499
    %v1508 = vmul.f32 %v1500, %v37
    %v1509 = vmul.f32 %v1501, %v37
    %v1510 = vmul.f32 %v1502, %v37
    %v1511 = vmul.f32 %v1503, %v37
    %v1512 = vmul.f32 %v1504, %v37
    %v1513 = vmul.f32 %v1505, %v37
    %v1514 = vmul.f32 %v1506, %v37
    %v1515 = vmul.f32 %v1507, %v37
    %v1516 = vadd.f32 %v1508, %v38
    %v1517 = vadd.f32 %v1509, %v38
    %v1518 = vadd.f32 %v1510, %v38
    %v1519 = vadd.f32 %v1511, %v38
    %v1520 = vadd.f32 %v1512, %v38
    %v1521 = vadd.f32 %v1513, %v38
    %v1522 = vadd.f32 %v1514, %v38
    %v1523 = vadd.f32 %v1515, %v38
    %v1524 = vpack.c.bf16 %v1517, %v1516
    %v1525 = vpack.c.bf16 %v1519, %v1518
    %v1526 = vpack.c.bf16 %v1521, %v1520
    %v1527 = vpack.c.bf16 %v1523, %v1522
    %v1528 = vld [vmem:[%s4] sm:$0xff]
    %v1529 = vld [vmem:[%s4 + $0x8] sm:$0xff]
    %v1530 = vld [vmem:[%s4 + $0x10] sm:$0xff]
    %v1531 = vld [vmem:[%s4 + $0x18] sm:$0xff]
    %v1533 = vperm.slane %v40, 0
    %v1534 = vperm.slane %v40, 1
    %v1541 = vunpack.c.l.b16 %v1528
    %v1542 = vunpack.c.h.b16 %v1528
    %v1543 = vunpack.c.l.b16 %v1529
    %v1544 = vunpack.c.h.b16 %v1529
    %v1545 = vunpack.c.l.b16 %v1530
    %v1546 = vunpack.c.h.b16 %v1530
    %v1547 = vunpack.c.l.b16 %v1531
    %v1548 = vunpack.c.h.b16 %v1531
    %v1549 = vpack.c.b16 %v1543, %v1541
    %v1550 = vpack.c.b16 %v1544, %v1542
    %v1551 = vpack.c.b16 %v1547, %v1545
    %v1552 = vpack.c.b16 %v1548, %v1546
    %v1558 = vsel %vm141, %v1524, 0
    %v1561 = vsel %vm141, %v1525, 0
    %v1564 = vsel %vm141, %v1526, 0
    %v1567 = vsel %vm141, %v1527, 0
    %1569 = vmatpush.bf16.msra.mxu0 0
    %1570 = vmatpush.bf16.msra.mxu0 0
    %1571 = vmatpush.bf16.msra.mxu0 0
    %1572 = vmatpush.bf16.msra.mxu0 0
    %1573 = vmatpush.bf16.msra.mxu0 0
    %1574 = vmatpush.bf16.msra.mxu0 0
    %1575 = vmatpush.bf16.msra.mxu0 %v1551
    %1576 = vmatpush.bf16.msra.mxu0 %v1549
    %1577 = vmatmul.bf16.gmra.mxu0 %v1558
    %v1578 = vpop.f32.mrf.mxu0
    %v1579 = vadd.f32 %v1533, %v1578
    %v1580 = vpop.f32.mrf.mxu0
    %v1581 = vadd.f32 %v1533, %v1580
    %1582 = vmatmul.bf16.gmra.mxu0 %v1561
    %v1583 = vpop.f32.mrf.mxu0
    %v1584 = vadd.f32 %v1533, %v1583
    %v1585 = vpop.f32.mrf.mxu0
    %v1586 = vadd.f32 %v1533, %v1585
    %1587 = vmatmul.bf16.gmra.mxu0 %v1564
    %v1588 = vpop.f32.mrf.mxu0
    %v1589 = vadd.f32 %v1533, %v1588
    %v1590 = vpop.f32.mrf.mxu0
    %v1591 = vadd.f32 %v1533, %v1590
    %1592 = vmatmul.bf16.gmra.mxu0 %v1567
    %v1593 = vpop.f32.mrf.mxu0
    %v1594 = vadd.f32 %v1533, %v1593
    %v1595 = vpop.f32.mrf.mxu0
    %v1596 = vadd.f32 %v1533, %v1595
    %1597 = vdwg.mxu0
    %1598 = vmatpush.bf16.msra.mxu0 0
    %1599 = vmatpush.bf16.msra.mxu0 0
    %1600 = vmatpush.bf16.msra.mxu0 0
    %1601 = vmatpush.bf16.msra.mxu0 0
    %1602 = vmatpush.bf16.msra.mxu0 0
    %1603 = vmatpush.bf16.msra.mxu0 0
    %1604 = vmatpush.bf16.msra.mxu0 %v1552
    %1605 = vmatpush.bf16.msra.mxu0 %v1550
    %1606 = vmatmul.bf16.gmra.mxu0 %v1558
    %v1607 = vpop.f32.mrf.mxu0
    %v1608 = vadd.f32 %v1534, %v1607
    %v1609 = vpop.f32.mrf.mxu0
    %v1610 = vadd.f32 %v1534, %v1609
    %1611 = vmatmul.bf16.gmra.mxu0 %v1561
    %v1612 = vpop.f32.mrf.mxu0
    %v1613 = vadd.f32 %v1534, %v1612
    %v1614 = vpop.f32.mrf.mxu0
    %v1615 = vadd.f32 %v1534, %v1614
    %1616 = vmatmul.bf16.gmra.mxu0 %v1564
    %v1617 = vpop.f32.mrf.mxu0
    %v1618 = vadd.f32 %v1534, %v1617
    %v1619 = vpop.f32.mrf.mxu0
    %v1620 = vadd.f32 %v1534, %v1619
    %1621 = vmatmul.bf16.gmra.mxu0 %v1567
    %v1622 = vpop.f32.mrf.mxu0
    %v1623 = vadd.f32 %v1534, %v1622
    %v1624 = vpop.f32.mrf.mxu0
    %v1625 = vadd.f32 %v1534, %v1624
    %1626 = vdwg.mxu0
    %v1627 = vmax.f32 %v1579, 0.0
    %v1628 = vmax.f32 %v1608, 0.0
    %v1629 = vmax.f32 %v1581, 0.0
    %v1630 = vmax.f32 %v1610, 0.0
    %v1631 = vmax.f32 %v1584, 0.0
    %v1632 = vmax.f32 %v1613, 0.0
    %v1633 = vmax.f32 %v1586, 0.0
    %v1634 = vmax.f32 %v1615, 0.0
    %v1635 = vmax.f32 %v1589, 0.0
    %v1636 = vmax.f32 %v1618, 0.0
    %v1637 = vmax.f32 %v1591, 0.0
    %v1638 = vmax.f32 %v1620, 0.0
    %v1639 = vmax.f32 %v1594, 0.0
    %v1640 = vmax.f32 %v1623, 0.0
    %v1641 = vmax.f32 %v1596, 0.0
    %v1642 = vmax.f32 %v1625, 0.0
    %v1643 = vpack.c.bf16 %v1629, %v1627
    %v1644 = vpack.c.bf16 %v1630, %v1628
    %v1645 = vpack.c.bf16 %v1633, %v1631
    %v1646 = vpack.c.bf16 %v1634, %v1632
    %v1647 = vpack.c.bf16 %v1637, %v1635
    %v1648 = vpack.c.bf16 %v1638, %v1636
    %v1649 = vpack.c.bf16 %v1641, %v1639
    %v1650 = vpack.c.bf16 %v1642, %v1640
    %v1651 = vld [vmem:[%s5] sm:$0xf]
    %v1652 = vld [vmem:[%s5 + $0x4] sm:$0xf]
    %v1653 = vld [vmem:[%s5 + $0x8] sm:$0xf]
    %v1654 = vld [vmem:[%s5 + $0xc] sm:$0xf]
    %v1655 = vld [vmem:[%s5 + $0x10] sm:$0xf]
    %v1656 = vld [vmem:[%s5 + $0x14] sm:$0xf]
    %v1657 = vld [vmem:[%s5 + $0x18] sm:$0xf]
    %v1658 = vld [vmem:[%s5 + $0x1c] sm:$0xf]
    %v1659 = vld [vmem:[%s5 + $0x20] sm:$0xf]
    %v1660 = vld [vmem:[%s5 + $0x24] sm:$0xf]
    %v1661 = vld [vmem:[%s5 + $0x28] sm:$0xf]
    %v1662 = vld [vmem:[%s5 + $0x2c] sm:$0xf]
    %v1663 = vld [vmem:[%s5 + $0x30] sm:$0xf]
    %v1664 = vld [vmem:[%s5 + $0x34] sm:$0xf]
    %v1665 = vld [vmem:[%s5 + $0x38] sm:$0xf]
    %v1666 = vld [vmem:[%s5 + $0x3c] sm:$0xf]
    %v1667 = vld [vmem:[%s5 + $0x40] sm:$0xf]
    %v1668 = vld [vmem:[%s5 + $0x44] sm:$0xf]
    %v1669 = vld [vmem:[%s5 + $0x48] sm:$0xf]
    %v1670 = vld [vmem:[%s5 + $0x4c] sm:$0xf]
    %v1671 = vld [vmem:[%s5 + $0x50] sm:$0xf]
    %v1672 = vld [vmem:[%s5 + $0x54] sm:$0xf]
    %v1673 = vld [vmem:[%s5 + $0x58] sm:$0xf]
    %v1674 = vld [vmem:[%s5 + $0x5c] sm:$0xf]
    %v1675 = vld [vmem:[%s5 + $0x60] sm:$0xf]
    %v1676 = vld [vmem:[%s5 + $0x64] sm:$0xf]
    %v1677 = vld [vmem:[%s5 + $0x68] sm:$0xf]
    %v1678 = vld [vmem:[%s5 + $0x6c] sm:$0xf]
    %v1679 = vld [vmem:[%s5 + $0x70] sm:$0xf]
    %v1680 = vld [vmem:[%s5 + $0x74] sm:$0xf]
    %v1681 = vld [vmem:[%s5 + $0x78] sm:$0xf]
    %v1682 = vld [vmem:[%s5 + $0x7c] sm:$0xf]
    %v1715 = vunpack.c.l.b16 %v1651
    %v1716 = vunpack.c.l.b16 %v1652
    %v1717 = vunpack.c.l.b16 %v1653
    %v1718 = vunpack.c.l.b16 %v1654
    %v1719 = vunpack.c.l.b16 %v1655
    %v1720 = vunpack.c.l.b16 %v1656
    %v1721 = vunpack.c.l.b16 %v1657
    %v1722 = vunpack.c.l.b16 %v1658
    %v1723 = vunpack.c.l.b16 %v1659
    %v1724 = vunpack.c.l.b16 %v1660
    %v1725 = vunpack.c.l.b16 %v1661
    %v1726 = vunpack.c.l.b16 %v1662
    %v1727 = vunpack.c.l.b16 %v1663
    %v1728 = vunpack.c.l.b16 %v1664
    %v1729 = vunpack.c.l.b16 %v1665
    %v1730 = vunpack.c.l.b16 %v1666
    %v1731 = vunpack.c.l.b16 %v1667
    %v1732 = vunpack.c.l.b16 %v1668
    %v1733 = vunpack.c.l.b16 %v1669
    %v1734 = vunpack.c.l.b16 %v1670
    %v1735 = vunpack.c.l.b16 %v1671
    %v1736 = vunpack.c.l.b16 %v1672
    %v1737 = vunpack.c.l.b16 %v1673
    %v1738 = vunpack.c.l.b16 %v1674
    %v1739 = vunpack.c.l.b16 %v1675
    %v1740 = vunpack.c.l.b16 %v1676
    %v1741 = vunpack.c.l.b16 %v1677
    %v1742 = vunpack.c.l.b16 %v1678
    %v1743 = vunpack.c.l.b16 %v1679
    %v1744 = vunpack.c.l.b16 %v1680
    %v1745 = vunpack.c.l.b16 %v1681
    %v1746 = vunpack.c.l.b16 %v1682
    %v1747 = vpack.c.b16 %v1716, %v1715
    %v1748 = vpack.c.b16 %v1718, %v1717
    %v1749 = vpack.c.b16 %v1720, %v1719
    %v1750 = vpack.c.b16 %v1722, %v1721
    %v1751 = vpack.c.b16 %v1724, %v1723
    %v1752 = vpack.c.b16 %v1726, %v1725
    %v1753 = vpack.c.b16 %v1728, %v1727
    %v1754 = vpack.c.b16 %v1730, %v1729
    %v1755 = vpack.c.b16 %v1732, %v1731
    %v1756 = vpack.c.b16 %v1734, %v1733
    %v1757 = vpack.c.b16 %v1736, %v1735
    %v1758 = vpack.c.b16 %v1738, %v1737
    %v1759 = vpack.c.b16 %v1740, %v1739
    %v1760 = vpack.c.b16 %v1742, %v1741
    %v1761 = vpack.c.b16 %v1744, %v1743
    %v1762 = vpack.c.b16 %v1746, %v1745
    %1779 = vmatpush.bf16.msra.mxu0 %v1754
    %1780 = vmatpush.bf16.msra.mxu0 %v1753
    %1781 = vmatpush.bf16.msra.mxu0 %v1752
    %1782 = vmatpush.bf16.msra.mxu0 %v1751
    %1783 = vmatpush.bf16.msra.mxu0 %v1750
    %1784 = vmatpush.bf16.msra.mxu0 %v1749
    %1785 = vmatpush.bf16.msra.mxu0 %v1748
    %1786 = vmatpush.bf16.msra.mxu0 %v1747
    %1787 = vmatmul.bf16.gmra.mxu0 %v1643
    %v1788 = vpop.f32.mrf.mxu0
    %v1789 = vadd.f32 %v41, %v1788
    %v1790 = vpop.f32.mrf.mxu0
    %v1791 = vadd.f32 %v41, %v1790
    %1792 = vmatmul.bf16.gmra.mxu0 %v1645
    %v1793 = vpop.f32.mrf.mxu0
    %v1794 = vadd.f32 %v41, %v1793
    %v1795 = vpop.f32.mrf.mxu0
    %v1796 = vadd.f32 %v41, %v1795
    %1797 = vmatmul.bf16.gmra.mxu0 %v1647
    %v1798 = vpop.f32.mrf.mxu0
    %v1799 = vadd.f32 %v41, %v1798
    %v1800 = vpop.f32.mrf.mxu0
    %v1801 = vadd.f32 %v41, %v1800
    %1802 = vmatmul.bf16.gmra.mxu0 %v1649
    %v1803 = vpop.f32.mrf.mxu0
    %v1804 = vadd.f32 %v41, %v1803
    %v1805 = vpop.f32.mrf.mxu0
    %v1806 = vadd.f32 %v41, %v1805
    %1807 = vdwg.mxu0
    %1808 = vmatpush.bf16.msra.mxu0 %v1762
    %1809 = vmatpush.bf16.msra.mxu0 %v1761
    %1810 = vmatpush.bf16.msra.mxu0 %v1760
    %1811 = vmatpush.bf16.msra.mxu0 %v1759
    %1812 = vmatpush.bf16.msra.mxu0 %v1758
    %1813 = vmatpush.bf16.msra.mxu0 %v1757
    %1814 = vmatpush.bf16.msra.mxu0 %v1756
    %1815 = vmatpush.bf16.msra.mxu0 %v1755
    %1816 = vmatmul.bf16.gmra.mxu0 %v1644
    %v1817 = vpop.f32.mrf.mxu0
    %v1818 = vadd.f32 %v1789, %v1817
    %v1819 = vpop.f32.mrf.mxu0
    %v1820 = vadd.f32 %v1791, %v1819
    %1821 = vmatmul.bf16.gmra.mxu0 %v1646
    %v1822 = vpop.f32.mrf.mxu0
    %v1823 = vadd.f32 %v1794, %v1822
    %v1824 = vpop.f32.mrf.mxu0
    %v1825 = vadd.f32 %v1796, %v1824
    %1826 = vmatmul.bf16.gmra.mxu0 %v1648
    %v1827 = vpop.f32.mrf.mxu0
    %v1828 = vadd.f32 %v1799, %v1827
    %v1829 = vpop.f32.mrf.mxu0
    %v1830 = vadd.f32 %v1801, %v1829
    %1831 = vmatmul.bf16.gmra.mxu0 %v1650
    %v1832 = vpop.f32.mrf.mxu0
    %v1833 = vadd.f32 %v1804, %v1832
    %v1834 = vpop.f32.mrf.mxu0
    %v1835 = vadd.f32 %v1806, %v1834
    %1836 = vdwg.mxu0
    %v1837 = vadd.f32 %v1516, %v1818
    %v1838 = vadd.f32 %v1517, %v1820
    %v1839 = vadd.f32 %v1518, %v1823
    %v1840 = vadd.f32 %v1519, %v1825
    %v1841 = vadd.f32 %v1520, %v1828
    %v1842 = vadd.f32 %v1521, %v1830
    %v1843 = vadd.f32 %v1522, %v1833
    %v1844 = vadd.f32 %v1523, %v1835
    %v1845 = vsel %vm141, %v1837, 0.0
    %1846 = vadd.xlane.f32.xlu0 %v1845
    %v1847 = vpop.xlane.xlu0 %1846
    %v1848 = vsel %vm141, %v1838, 0.0
    %1849 = vadd.xlane.f32.xlu0 %v1848
    %v1850 = vpop.xlane.xlu0 %1849
    %v1851 = vsel %vm141, %v1839, 0.0
    %1852 = vadd.xlane.f32.xlu0 %v1851
    %v1853 = vpop.xlane.xlu0 %1852
    %v1854 = vsel %vm141, %v1840, 0.0
    %1855 = vadd.xlane.f32.xlu0 %v1854
    %v1856 = vpop.xlane.xlu0 %1855
    %v1857 = vsel %vm141, %v1841, 0.0
    %1858 = vadd.xlane.f32.xlu0 %v1857
    %v1859 = vpop.xlane.xlu0 %1858
    %v1860 = vsel %vm141, %v1842, 0.0
    %1861 = vadd.xlane.f32.xlu0 %v1860
    %v1862 = vpop.xlane.xlu0 %1861
    %v1863 = vsel %vm141, %v1843, 0.0
    %1864 = vadd.xlane.f32.xlu0 %v1863
    %v1865 = vpop.xlane.xlu0 %1864
    %v1866 = vsel %vm141, %v1844, 0.0
    %1867 = vadd.xlane.f32.xlu0 %v1866
    %v1868 = vpop.xlane.xlu0 %1867
    %v1869 = vmul.f32 %v1847, %v1355
    %v1870 = vmul.f32 %v1850, %v1355
    %v1871 = vmul.f32 %v1853, %v1355
    %v1872 = vmul.f32 %v1856, %v1355
    %v1873 = vmul.f32 %v1859, %v1355
    %v1874 = vmul.f32 %v1862, %v1355
    %v1875 = vmul.f32 %v1865, %v1355
    %v1876 = vmul.f32 %v1868, %v1355
    %v1877 = vsub.f32 %v1837, %v1869
    %v1878 = vsub.f32 %v1838, %v1870
    %v1879 = vsub.f32 %v1839, %v1871
    %v1880 = vsub.f32 %v1840, %v1872
    %v1881 = vsub.f32 %v1841, %v1873
    %v1882 = vsub.f32 %v1842, %v1874
    %v1883 = vsub.f32 %v1843, %v1875
    %v1884 = vsub.f32 %v1844, %v1876
    %v1885 = vmul.f32 %v1877, %v1877
    %v1886 = vmul.f32 %v1878, %v1878
    %v1887 = vmul.f32 %v1879, %v1879
    %v1888 = vmul.f32 %v1880, %v1880
    %v1889 = vmul.f32 %v1881, %v1881
    %v1890 = vmul.f32 %v1882, %v1882
    %v1891 = vmul.f32 %v1883, %v1883
    %v1892 = vmul.f32 %v1884, %v1884
    %v1893 = vsel %vm141, %v1885, 0.0
    %1894 = vadd.xlane.f32.xlu0 %v1893
    %v1895 = vpop.xlane.xlu0 %1894
    %v1896 = vsel %vm141, %v1886, 0.0
    %1897 = vadd.xlane.f32.xlu0 %v1896
    %v1898 = vpop.xlane.xlu0 %1897
    %v1899 = vsel %vm141, %v1887, 0.0
    %1900 = vadd.xlane.f32.xlu0 %v1899
    %v1901 = vpop.xlane.xlu0 %1900
    %v1902 = vsel %vm141, %v1888, 0.0
    %1903 = vadd.xlane.f32.xlu0 %v1902
    %v1904 = vpop.xlane.xlu0 %1903
    %v1905 = vsel %vm141, %v1889, 0.0
    %1906 = vadd.xlane.f32.xlu0 %v1905
    %v1907 = vpop.xlane.xlu0 %1906
    %v1908 = vsel %vm141, %v1890, 0.0
    %1909 = vadd.xlane.f32.xlu0 %v1908
    %v1910 = vpop.xlane.xlu0 %1909
    %v1911 = vsel %vm141, %v1891, 0.0
    %1912 = vadd.xlane.f32.xlu0 %v1911
    %v1913 = vpop.xlane.xlu0 %1912
    %v1914 = vsel %vm141, %v1892, 0.0
    %1915 = vadd.xlane.f32.xlu0 %v1914
    %v1916 = vpop.xlane.xlu0 %1915
    %v1917 = vmul.f32 %v1895, %v1355
    %v1918 = vmul.f32 %v1898, %v1355
    %v1919 = vmul.f32 %v1901, %v1355
    %v1920 = vmul.f32 %v1904, %v1355
    %v1921 = vmul.f32 %v1907, %v1355
    %v1922 = vmul.f32 %v1910, %v1355
    %v1923 = vmul.f32 %v1913, %v1355
    %v1924 = vmul.f32 %v1916, %v1355
    %v1925 = vadd.f32 %v1917, 1e-05
    %v1926 = vadd.f32 %v1918, 1e-05
    %v1927 = vadd.f32 %v1919, 1e-05
    %v1928 = vadd.f32 %v1920, 1e-05
    %v1929 = vadd.f32 %v1921, 1e-05
    %v1930 = vadd.f32 %v1922, 1e-05
    %v1931 = vadd.f32 %v1923, 1e-05
    %v1932 = vadd.f32 %v1924, 1e-05
    %v1933 = vrsqrt.pop %v1925
    %v1934 = vmul.f32 %v1933, %v1925
    %v1935 = vmul.f32 %v1934, %v1933
    %v1936 = vmul.f32 0.5, %v1935
    %v1937 = vsub.f32 1.5, %v1936
    %v1938 = vmul.f32 %v1933, %v1937
    %vm1939 = vweird.f32 %v1925
    %vm1940 = vweird.f32 %v1933
    %vm1941 = vmor %vm1939, %vm1940
    %v1942 = vsel %vm1941, %v1933, %v1938
    %v1943 = vrsqrt.pop %v1926
    %v1944 = vmul.f32 %v1943, %v1926
    %v1945 = vmul.f32 %v1944, %v1943
    %v1946 = vmul.f32 0.5, %v1945
    %v1947 = vsub.f32 1.5, %v1946
    %v1948 = vmul.f32 %v1943, %v1947
    %vm1949 = vweird.f32 %v1926
    %vm1950 = vweird.f32 %v1943
    %vm1951 = vmor %vm1949, %vm1950
    %v1952 = vsel %vm1951, %v1943, %v1948
    %v1953 = vrsqrt.pop %v1927
    %v1954 = vmul.f32 %v1953, %v1927
    %v1955 = vmul.f32 %v1954, %v1953
    %v1956 = vmul.f32 0.5, %v1955
    %v1957 = vsub.f32 1.5, %v1956
    %v1958 = vmul.f32 %v1953, %v1957
    %vm1959 = vweird.f32 %v1927
    %vm1960 = vweird.f32 %v1953
    %vm1961 = vmor %vm1959, %vm1960
    %v1962 = vsel %vm1961, %v1953, %v1958
    %v1963 = vrsqrt.pop %v1928
    %v1964 = vmul.f32 %v1963, %v1928
    %v1965 = vmul.f32 %v1964, %v1963
    %v1966 = vmul.f32 0.5, %v1965
    %v1967 = vsub.f32 1.5, %v1966
    %v1968 = vmul.f32 %v1963, %v1967
    %vm1969 = vweird.f32 %v1928
    %vm1970 = vweird.f32 %v1963
    %vm1971 = vmor %vm1969, %vm1970
    %v1972 = vsel %vm1971, %v1963, %v1968
    %v1973 = vrsqrt.pop %v1929
    %v1974 = vmul.f32 %v1973, %v1929
    %v1975 = vmul.f32 %v1974, %v1973
    %v1976 = vmul.f32 0.5, %v1975
    %v1977 = vsub.f32 1.5, %v1976
    %v1978 = vmul.f32 %v1973, %v1977
    %vm1979 = vweird.f32 %v1929
    %vm1980 = vweird.f32 %v1973
    %vm1981 = vmor %vm1979, %vm1980
    %v1982 = vsel %vm1981, %v1973, %v1978
    %v1983 = vrsqrt.pop %v1930
    %v1984 = vmul.f32 %v1983, %v1930
    %v1985 = vmul.f32 %v1984, %v1983
    %v1986 = vmul.f32 0.5, %v1985
    %v1987 = vsub.f32 1.5, %v1986
    %v1988 = vmul.f32 %v1983, %v1987
    %vm1989 = vweird.f32 %v1930
    %vm1990 = vweird.f32 %v1983
    %vm1991 = vmor %vm1989, %vm1990
    %v1992 = vsel %vm1991, %v1983, %v1988
    %v1993 = vrsqrt.pop %v1931
    %v1994 = vmul.f32 %v1993, %v1931
    %v1995 = vmul.f32 %v1994, %v1993
    %v1996 = vmul.f32 0.5, %v1995
    %v1997 = vsub.f32 1.5, %v1996
    %v1998 = vmul.f32 %v1993, %v1997
    %vm1999 = vweird.f32 %v1931
    %vm2000 = vweird.f32 %v1993
    %vm2001 = vmor %vm1999, %vm2000
    %v2002 = vsel %vm2001, %v1993, %v1998
    %v2003 = vrsqrt.pop %v1932
    %v2004 = vmul.f32 %v2003, %v1932
    %v2005 = vmul.f32 %v2004, %v2003
    %v2006 = vmul.f32 0.5, %v2005
    %v2007 = vsub.f32 1.5, %v2006
    %v2008 = vmul.f32 %v2003, %v2007
    %vm2009 = vweird.f32 %v1932
    %vm2010 = vweird.f32 %v2003
    %vm2011 = vmor %vm2009, %vm2010
    %v2012 = vsel %vm2011, %v2003, %v2008
    %v2013 = vmul.f32 %v1877, %v1942
    %v2014 = vmul.f32 %v1878, %v1952
    %v2015 = vmul.f32 %v1879, %v1962
    %v2016 = vmul.f32 %v1880, %v1972
    %v2017 = vmul.f32 %v1881, %v1982
    %v2018 = vmul.f32 %v1882, %v1992
    %v2019 = vmul.f32 %v1883, %v2002
    %v2020 = vmul.f32 %v1884, %v2012
    %v2021 = vmul.f32 %v2013, %v42
    %v2022 = vmul.f32 %v2014, %v42
    %v2023 = vmul.f32 %v2015, %v42
    %v2024 = vmul.f32 %v2016, %v42
    %v2025 = vmul.f32 %v2017, %v42
    %v2026 = vmul.f32 %v2018, %v42
    %v2027 = vmul.f32 %v2019, %v42
    %v2028 = vmul.f32 %v2020, %v42
    %v2029 = vadd.f32 %v2021, %v43
    %v2030 = vadd.f32 %v2022, %v43
    %v2031 = vadd.f32 %v2023, %v43
    %v2032 = vadd.f32 %v2024, %v43
    %v2033 = vadd.f32 %v2025, %v43
    %v2034 = vadd.f32 %v2026, %v43
    %v2035 = vadd.f32 %v2027, %v43
    %v2036 = vadd.f32 %v2028, %v43
    %v2037 = vsel %vm141, %v2029, 0.0
    %v2038 = vrot.slane %v2037, 4
    %v2039 = vadd.f32 %v2037, %v2038
    %v2040 = vrot.slane %v2039, 2
    %v2041 = vadd.f32 %v2039, %v2040
    %v2042 = vrot.slane %v2041, 1
    %v2043 = vadd.f32 %v2041, %v2042
    %v2044 = vsel %vm141, %v2030, 0.0
    %v2045 = vrot.slane %v2044, 4
    %v2046 = vadd.f32 %v2044, %v2045
    %v2047 = vrot.slane %v2046, 2
    %v2048 = vadd.f32 %v2046, %v2047
    %v2049 = vrot.slane %v2048, 1
    %v2050 = vadd.f32 %v2048, %v2049
    %v2051 = vsel %vm141, %v2031, 0.0
    %v2052 = vrot.slane %v2051, 4
    %v2053 = vadd.f32 %v2051, %v2052
    %v2054 = vrot.slane %v2053, 2
    %v2055 = vadd.f32 %v2053, %v2054
    %v2056 = vrot.slane %v2055, 1
    %v2057 = vadd.f32 %v2055, %v2056
    %v2058 = vsel %vm141, %v2032, 0.0
    %v2059 = vrot.slane %v2058, 4
    %v2060 = vadd.f32 %v2058, %v2059
    %v2061 = vrot.slane %v2060, 2
    %v2062 = vadd.f32 %v2060, %v2061
    %v2063 = vrot.slane %v2062, 1
    %v2064 = vadd.f32 %v2062, %v2063
    %v2065 = vsel %vm141, %v2033, 0.0
    %v2066 = vrot.slane %v2065, 4
    %v2067 = vadd.f32 %v2065, %v2066
    %v2068 = vrot.slane %v2067, 2
    %v2069 = vadd.f32 %v2067, %v2068
    %v2070 = vrot.slane %v2069, 1
    %v2071 = vadd.f32 %v2069, %v2070
    %v2072 = vsel %vm141, %v2034, 0.0
    %v2073 = vrot.slane %v2072, 4
    %v2074 = vadd.f32 %v2072, %v2073
    %v2075 = vrot.slane %v2074, 2
    %v2076 = vadd.f32 %v2074, %v2075
    %v2077 = vrot.slane %v2076, 1
    %v2078 = vadd.f32 %v2076, %v2077
    %v2079 = vsel %vm141, %v2035, 0.0
    %v2080 = vrot.slane %v2079, 4
    %v2081 = vadd.f32 %v2079, %v2080
    %v2082 = vrot.slane %v2081, 2
    %v2083 = vadd.f32 %v2081, %v2082
    %v2084 = vrot.slane %v2083, 1
    %v2085 = vadd.f32 %v2083, %v2084
    %v2086 = vsel %vm141, %v2036, 0.0
    %v2087 = vrot.slane %v2086, 4
    %v2088 = vadd.f32 %v2086, %v2087
    %v2089 = vrot.slane %v2088, 2
    %v2090 = vadd.f32 %v2088, %v2089
    %v2091 = vrot.slane %v2090, 1
    %v2092 = vadd.f32 %v2090, %v2091
    %v2093 = vrcp.pop 8.0
    %v2094 = vmul.f32 8.0, %v2093
    %v2095 = vsub.f32 1.0, %v2094
    %v2096 = vmul.f32 %v2093, %v2095
    %v2097 = vadd.f32 %v2093, %v2096
    %vm2098 = vweird.f32 %v2093
    %v2099 = vsel %vm2098, %v2093, %v2097
    %v2100 = vmul.f32 %v2043, %v2099
    %v2101 = vmul.f32 %v2050, %v2099
    %v2102 = vmul.f32 %v2057, %v2099
    %v2103 = vmul.f32 %v2064, %v2099
    %v2104 = vmul.f32 %v2071, %v2099
    %v2105 = vmul.f32 %v2078, %v2099
    %v2106 = vmul.f32 %v2085, %v2099
    %v2107 = vmul.f32 %v2092, %v2099
    %v2108 = vpack.c.bf16 %v2100, %v2100
    %v2109 = vpack.c.bf16 %v2101, %v2101
    %v2110 = vpack.c.bf16 %v2102, %v2102
    %v2111 = vpack.c.bf16 %v2103, %v2103
    %v2112 = vpack.c.bf16 %v2104, %v2104
    %v2113 = vpack.c.bf16 %v2105, %v2105
    %v2114 = vpack.c.bf16 %v2106, %v2106
    %v2115 = vpack.c.bf16 %v2107, %v2107
    %v2116 = vld [vmem:[%s6] sm:$0xf]
    %v2117 = vld [vmem:[%s6 + $0x4] sm:$0xf]
    %v2118 = vld [vmem:[%s6 + $0x8] sm:$0xf]
    %v2119 = vld [vmem:[%s6 + $0xc] sm:$0xf]
    %v2128 = vunpack.c.l.b16 %v2108
    %v2129 = vunpack.c.l.b16 %v2109
    %v2130 = vunpack.c.l.b16 %v2110
    %v2131 = vunpack.c.l.b16 %v2111
    %v2132 = vunpack.c.l.b16 %v2112
    %v2133 = vunpack.c.l.b16 %v2113
    %v2134 = vunpack.c.l.b16 %v2114
    %v2135 = vunpack.c.l.b16 %v2115
    %vm2136 = vcmask 1041409
    %v2137 = vsel %vm2136, %v2129, %v2128
    %vm2138 = vcmask 1042434
    %v2139 = vsel %vm2138, %v2130, %v2137
    %vm2140 = vcmask 1043459
    %v2141 = vsel %vm2140, %v2131, %v2139
    %vm2142 = vcmask 1044484
    %v2143 = vsel %vm2142, %v2132, %v2141
    %vm2144 = vcmask 1045509
    %v2145 = vsel %vm2144, %v2133, %v2143
    %vm2146 = vcmask 1046534
    %v2147 = vsel %vm2146, %v2134, %v2145
    %vm2148 = vcmask 1047559
    %v2149 = vsel %vm2148, %v2135, %v2147
    %v2150 = vpack.c.b16 %v2149, %v2149
    %v2155 = vunpack.c.l.b16 %v2116
    %v2156 = vunpack.c.l.b16 %v2117
    %v2157 = vunpack.c.l.b16 %v2118
    %v2158 = vunpack.c.l.b16 %v2119
    %v2159 = vpack.c.b16 %v2156, %v2155
    %v2160 = vpack.c.b16 %v2158, %v2157
    %v2164 = vsel %vm141, %v2150, 0
    %2166 = vmatpush.bf16.msra.mxu0 0
    %2167 = vmatpush.bf16.msra.mxu0 0
    %2168 = vmatpush.bf16.msra.mxu0 0
    %2169 = vmatpush.bf16.msra.mxu0 0
    %2170 = vmatpush.bf16.msra.mxu0 0
    %2171 = vmatpush.bf16.msra.mxu0 0
    %2172 = vmatpush.bf16.msra.mxu0 %v2160
    %2173 = vmatpush.bf16.msra.mxu0 %v2159
    %2174 = vmatmul.bf16.gmra.mxu0 %v2164
    %v2175 = vpop.f32.mrf.mxu0
    %v2176 = vadd.f32 %v44, %v2175
    %v2177 = vpop.f32.mrf.mxu0
    %2178 = vdwg.mxu0
    %v2179 = vmax.f32 %v2176, 0.0
    %v2180 = vpack.c.bf16 %v2179, %v2179
    %v2181 = vld [vmem:[%s7] sm:$0xf]
    %v2182 = vld [vmem:[%s7 + $0x4] sm:$0xf]
    %v2183 = vld [vmem:[%s7 + $0x8] sm:$0xf]
    %v2184 = vld [vmem:[%s7 + $0xc] sm:$0xf]
    %v2189 = vunpack.c.l.b16 %v2181
    %v2190 = vunpack.c.l.b16 %v2182
    %v2191 = vunpack.c.l.b16 %v2183
    %v2192 = vunpack.c.l.b16 %v2184
    %v2193 = vpack.c.b16 %v2190, %v2189
    %v2194 = vpack.c.b16 %v2192, %v2191
    %v2198 = vsel %vm141, %v2180, 0
    %2200 = vmatpush.bf16.msra.mxu0 0
    %2201 = vmatpush.bf16.msra.mxu0 0
    %2202 = vmatpush.bf16.msra.mxu0 0
    %2203 = vmatpush.bf16.msra.mxu0 0
    %2204 = vmatpush.bf16.msra.mxu0 0
    %2205 = vmatpush.bf16.msra.mxu0 0
    %2206 = vmatpush.bf16.msra.mxu0 %v2194
    %2207 = vmatpush.bf16.msra.mxu0 %v2193
    %2208 = vmatmul.bf16.gmra.mxu0 %v2198
    %v2209 = vpop.f32.mrf.mxu0
    %v2210 = vadd.f32 %v45, %v2209
    %v2211 = vpop.f32.mrf.mxu0
    %2212 = vdwg.mxu0
    %2213 = vst.msk [vmem:[#allocation2] sm:$0xff] %vm75, %v2210
    // Predicated region
    $region38: #{tpu_custom_call.1} parent=1 // pred_check
      _
    $region39: #{tpu_custom_call.1} parent=1 // pred_check_branch
      %2215 = sbr.rel (0) target = $region41
    $region40: #{tpu_custom_call.1} parent=1 // pred_region
      %2217 = vsyncadd [#allocation3], 0
      %s2219 = sshll.u32 [#allocation2], 4
      %s2220 = int_to_ptr.vmem [resolvable:$true] %s2219
      %s2221 = sshll.u32 %s9, 4
      %s2222 = int_to_ptr.hbm [resolvable:$true] %s2221
      %2224 = dma.vmem_to_hbm [thread:$0]  %s2220, 128, %s2222, [#allocation3]
    $region41: #{tpu_custom_call.1} parent=1 // pred_fallthru
      _
    // Predicated region
    $region42: #{tpu_custom_call.1} parent=1 // pred_check
      _
    $region43: #{tpu_custom_call.1} parent=1 // pred_check_branch
      %2226 = sbr.rel (0) target = $region45
    $region44: #{tpu_custom_call.1} parent=1 // pred_region
      %2228 = dma.done [#allocation3], 128
    $region45: #{tpu_custom_call.1} parent=1 // pred_fallthru
      _
    %2229 = vsyncpa [#allocation3], 1

</llo_original>
